<compile_context>
chip_gen: v7x
topology: tpu7x:2x2x1
jax: 0.10.0
libtpu: 0.0.40
codegen_flags: <defaults>
</compile_context>

<pallas_src>
import jax
import jax.numpy as jnp
from jax.experimental import pallas as pl
from jax.experimental.pallas import tpu as pltpu

# ----------------------------------------------------------------------------
# hyper-parameters (canonical defaults of RegularizedFMNet / SURFMNetLoss)
# ----------------------------------------------------------------------------
FM_LAMBDA = 1e-3       # resolvent regularization weight
FM_GAMMA = 0.5         # resolvent gamma
W_BIJ = 1.0
W_ORTH = 1.0
W_LAP = 1e-3

# Row/col tile of the two O(N^2) kernels.  512 amortizes per-step overhead and
# fills the 256-wide MXU on v6e/v7x; double-buffered VMEM stays ~2-3 MiB.
TILE = 512
# N-reduction tile of the spectral-projection kernel (overhead-bound otherwise).
SPEC_TILE = 2048

# MXU stream dtype for the Gram matmuls (accumulation stays f32, squared norms
# and kNN thresholds stay f32).  bf16 is the native MXU dtype on all targets.
GRAM_DTYPE = jnp.bfloat16

# Scoped-VMEM limit: v5e's default is 16 MiB, too tight once feat is resident
# and tiles are 512-wide; 64 MiB is safe on every generation for these sizes.
_VMEM_LIMIT = 64 * 1024 * 1024

_VMEM = pl.BlockSpec(memory_space=pltpu.MemorySpace.VMEM)
_SMEM = pl.BlockSpec(memory_space=pltpu.MemorySpace.SMEM)


def _pick_tile(n, pref):
    """Largest tile <= pref that is a multiple of 128 and divides n.

    Falls back to the full extent only when no such tile exists (the previous
    version fell back for ANY non-divisor `pref`, which could silently blow the
    scoped VMEM limit — worst on v7x's 64 MiB physical VMEM).
    """
    start = (min(pref, n) // 128) * 128
    for t in range(start, 127, -128):
        if n % t == 0:
            return t
    # TODO(synk): for large awkward N, pad up to a multiple of 128 and mask the
    # padded rows instead of taking a single full-extent tile.
    return n


# ----------------------------------------------------------------------------
# Kernel 1 (tiled): pairwise gaussian affinity
#   W_ij = exp(-||f_i - f_j||^2 / (2 sigma^2)),  one (t, t) tile per grid step.
#   Column-side operands are VMEM-resident (constant index_map), sliced with
#   pl.ds in-kernel.  The global diagonal is written as -inf (ready for top_k).
# ----------------------------------------------------------------------------
def pairwise_affinity(feat_g, sq_col, sq_row, neg_inv_2s2, *, tile=TILE):
    n, d = feat_g.shape
    t = _pick_tile(n, tile)
    nb = n // t

    def kernel(sig_ref, fi_ref, sqi_ref, fj_ref, sqj_ref, w_ref):
        i = pl.program_id(0)
        j = pl.program_id(1)
        neg_inv = sig_ref[0, 0]                                      # SMEM scalar
        col = pl.multiple_of(j * t, t)
        fj = fj_ref[pl.ds(col, t), :]                                # resident slice
        sqj = sqj_ref[:, pl.ds(col, t)]
        dn = (((1,), (1,)), ((), ()))                                # contract D
        g = jax.lax.dot_general(fi_ref[...], fj, dn,
                                preferred_element_type=jnp.float32)  # (t, t) MXU
        d2 = jnp.maximum(sqi_ref[...] + sqj - 2.0 * g, 0.0)          # (t,1)+(1,t)
        w = jnp.exp(d2 * neg_inv)                                    # EUP

        @pl.when(i != j)
        def _():
            w_ref[...] = w

        @pl.when(i == j)                                             # diag block only
        def _():
            li = jax.lax.broadcasted_iota(jnp.int32, (t, t), 0)
            lj = jax.lax.broadcasted_iota(jnp.int32, (t, t), 1)
            w_ref[...] = jnp.where(li == lj, -jnp.inf, w)

    return pl.pallas_call(
        kernel,
        out_shape=jax.ShapeDtypeStruct((n, n), jnp.float32),
        grid=(nb, nb),
        in_specs=[
            _SMEM,                                                   # -1/(2 s^2)
            pl.BlockSpec((t, d), lambda i, j: (i, 0)),               # feat rows i
            pl.BlockSpec((t, 1), lambda i, j: (i, 0)),               # ||f_i||^2
            pl.BlockSpec((n, d), lambda i, j: (0, 0)),               # resident feat (cols)
            pl.BlockSpec((1, n), lambda i, j: (0, 0)),               # resident ||f_j||^2
        ],
        out_specs=pl.BlockSpec((t, t), lambda i, j: (i, j)),
        compiler_params=pltpu.CompilerParams(
            dimension_semantics=("parallel", "parallel"),
            vmem_limit_bytes=_VMEM_LIMIT),
    )(neg_inv_2s2, feat_g, sq_col, feat_g, sq_row)


# ----------------------------------------------------------------------------
# Kernel 2 (tiled): kNN mask + elementwise symmetrization + Laplacian L = D - W
#   Recomputes the affinity tile from feat (no re-read of the [N, N] W).
#   Column blocks are visited in rotated order (i+1, ..., i) so the diagonal
#   block is last and receives the completed degree accumulator.  Diagonal-only
#   work (iotas / eye masking / D on the diagonal) is gated by pl.when.
# ----------------------------------------------------------------------------
def graph_laplacian_from_feat(feat_g, sq_col, sq_row, thresh_col, thresh_row,
                              neg_inv_2s2, *, tile=TILE):
    n, d = feat_g.shape
    t = _pick_tile(n, tile)
    nb = n // t

    def kernel(sig_ref, fi_ref, sqi_ref, thi_ref, fj_ref, sqj_ref, thj_ref,
               l_ref, deg_ref):
        i = pl.program_id(0)
        j = pl.program_id(1)
        cj = (i + 1 + j) % nb                                        # rotated column block

        neg_inv = sig_ref[0, 0]
        col = pl.multiple_of(cj * t, t)
        fj = fj_ref[pl.ds(col, t), :]
        sqj = sqj_ref[:, pl.ds(col, t)]
        thj = thj_ref[:, pl.ds(col, t)]

        dn = (((1,), (1,)), ((), ()))
        g = jax.lax.dot_general(fi_ref[...], fj, dn,
                                preferred_element_type=jnp.float32)  # (t, t)
        d2 = jnp.maximum(sqi_ref[...] + sqj - 2.0 * g, 0.0)
        w = jnp.exp(d2 * neg_inv)

        # symmetrized kNN mask without any transpose (w is symmetric):
        #   ws_ij = 0.5 * w_ij * [(w_ij >= th_i) + (w_ij >= th_j)]
        keep_i = (w >= thi_ref[...]).astype(jnp.float32)             # vs (t,1)
        keep_j = (w >= thj).astype(jnp.float32)                      # vs (1,t)
        ws = 0.5 * w * (keep_i + keep_j)

        @pl.when(j == 0)
        def _():
            deg_ref[...] = jnp.zeros_like(deg_ref)

        # rotation puts the diagonal block (cj == i) at the last j step, so the
        # degree accumulator is complete exactly when it is needed.
        @pl.when(j != nb - 1)
        def _():
            deg_ref[...] += jnp.sum(ws, axis=1, keepdims=True)       # (t, 1)
            l_ref[...] = -ws

        @pl.when(j == nb - 1)                                        # diagonal block
        def _():
            li = jax.lax.broadcasted_iota(jnp.int32, (t, t), 0)
            lj = jax.lax.broadcasted_iota(jnp.int32, (t, t), 1)
            off_diag = (li != lj).astype(jnp.float32)
            ws_nd = ws * off_diag                                    # zero the diagonal
            deg = deg_ref[...] + jnp.sum(ws_nd, axis=1, keepdims=True)
            deg_ref[...] = deg
            l_ref[...] = (1.0 - off_diag) * deg - ws_nd              # D on diag, -W off

    return pl.pallas_call(
        kernel,
        out_shape=jax.ShapeDtypeStruct((n, n), jnp.float32),
        grid=(nb, nb),
        in_specs=[
            _SMEM,
            pl.BlockSpec((t, d), lambda i, j: (i, 0)),               # feat rows i
            pl.BlockSpec((t, 1), lambda i, j: (i, 0)),               # ||f_i||^2
            pl.BlockSpec((t, 1), lambda i, j: (i, 0)),               # threshold rows i
            pl.BlockSpec((n, d), lambda i, j: (0, 0)),               # resident feat (cols)
            pl.BlockSpec((1, n), lambda i, j: (0, 0)),               # resident ||f_j||^2
            pl.BlockSpec((1, n), lambda i, j: (0, 0)),               # resident thresholds
        ],
        out_specs=pl.BlockSpec((t, t), lambda i, j: (i, (i + 1 + j) % nb)),
        scratch_shapes=[pltpu.VMEM((t, 1), jnp.float32)],
        compiler_params=pltpu.CompilerParams(
            dimension_semantics=("parallel", "arbitrary"),
            vmem_limit_bytes=_VMEM_LIMIT),
    )(neg_inv_2s2, feat_g, sq_col, thresh_col, feat_g, sq_row, thresh_row)


def laplacian_spectrum(feat, k_spec, knn, *, tile=TILE):
    """Latent_knn_graph_construct (symmetrize=True) + laplacian_main_sparse."""
    feat = feat.astype(jnp.float32)
    n = feat.shape[0]

    # O(N D) glue: squared norms + self-tuned bandwidth.
    #   mean_{i,j} ||f_i - f_j||^2 = 2*mean||f||^2 - 2*||mean f||^2
    sq = jnp.sum(feat * feat, axis=1, keepdims=True)                 # [N, 1], f32
    mean_f = jnp.mean(feat, axis=0)
    sigma2 = 2.0 * jnp.mean(sq) - 2.0 * jnp.dot(mean_f, mean_f) + 1e-6
    neg_inv_2s2 = (-0.5 / sigma2).reshape(1, 1).astype(jnp.float32)
    sq_t = sq.reshape(1, n)

    feat_g = feat.astype(GRAM_DTYPE)                                 # MXU stream dtype
    # W has -inf on the diagonal already (written in-kernel), ready for top_k.
    w_aff = pairwise_affinity(feat_g, sq, sq_t, neg_inv_2s2, tile=tile)

    # per-row kNN threshold = knn-th largest off-diagonal affinity.
    # TODO(synk): for large N, replace the full [N, N] materialization + exact
    # top_k with an in-kernel running top-k scratch (or jax.lax.approx_max_k)
    # so only the [N, 1] threshold ever leaves the affinity kernel.
    topk_vals, _ = jax.lax.top_k(w_aff, knn)
    thresh = topk_vals[:, knn - 1:knn]                               # [N, 1], f32
    thresh_t = thresh.reshape(1, n)

    lap = graph_laplacian_from_feat(feat_g, sq, sq_t, thresh, thresh_t,
                                    neg_inv_2s2, tile=tile)

    # TODO(synk): scipy.sparse.linalg.eigsh (sparse k-smallest eigensolver) has
    # no Pallas equivalent; dense jnp.linalg.eigh is used here (glue).
    vals, vecs = jnp.linalg.eigh(lap)
    vals = jnp.maximum(vals, 0.0)                                    # clip numerical negatives
    return vecs[:, :k_spec], vals[:k_spec]


# ----------------------------------------------------------------------------
# Kernel 3: RegularizedFMNet spectral projections + Gram matrices
#   A = Phi_x^T F_x, B = Phi_y^T F_y;  outputs [A A^T | B A^T | B B^T | A B^T]
#   packed in a single [K, 4K] slab.  N is a long reduction grid axis.
# ----------------------------------------------------------------------------
def _spectral_kernel(phixT_ref, fx_ref, phiyT_ref, fy_ref, grams_ref,
                     a_acc, b_acc):
    j = pl.program_id(0)

    @pl.when(j == 0)
    def _():
        a_acc[...] = jnp.zeros_like(a_acc)
        b_acc[...] = jnp.zeros_like(b_acc)

    a_acc[...] += jnp.dot(phixT_ref[...], fx_ref[...],
                          preferred_element_type=jnp.float32)        # [K, D]
    b_acc[...] += jnp.dot(phiyT_ref[...], fy_ref[...],
                          preferred_element_type=jnp.float32)        # [K, D]

    @pl.when(j == pl.num_programs(0) - 1)
    def _():
        a = a_acc[...]
        b = b_acc[...]
        k = a.shape[0]
        dn = (((1,), (1,)), ((), ()))                                # contract D
        grams_ref[:, 0 * k:1 * k] = jax.lax.dot_general(
            a, a, dn, preferred_element_type=jnp.float32)
        grams_ref[:, 1 * k:2 * k] = jax.lax.dot_general(
            b, a, dn, preferred_element_type=jnp.float32)
        grams_ref[:, 2 * k:3 * k] = jax.lax.dot_general(
            b, b, dn, preferred_element_type=jnp.float32)
        grams_ref[:, 3 * k:4 * k] = jax.lax.dot_general(
            a, b, dn, preferred_element_type=jnp.float32)


def spectral_products(evecs_x, feat_x, evecs_y, feat_y, *, tile=SPEC_TILE):
    n, k = evecs_x.shape
    d = feat_x.shape[1]
    t = _pick_tile(n, tile)
    nj = n // t
    # One-time layout plumbing in glue: [N, K] -> [K, N] so the kernel matmuls
    # are the natural MXU form (no in-kernel transpose of an [N, *] operand).
    phixT = jnp.transpose(evecs_x).astype(jnp.float32)
    phiyT = jnp.transpose(evecs_y).astype(jnp.float32)
    grams = pl.pallas_call(
        _spectral_kernel,
        out_shape=jax.ShapeDtypeStruct((k, 4 * k), jnp.float32),
        grid=(nj,),
        in_specs=[
            pl.BlockSpec((k, t), lambda j: (0, j)),
            pl.BlockSpec((t, d), lambda j: (j, 0)),
            pl.BlockSpec((k, t), lambda j: (0, j)),
            pl.BlockSpec((t, d), lambda j: (j, 0)),
        ],
        out_specs=pl.BlockSpec((k, 4 * k), lambda j: (0, 0)),
        scratch_shapes=[pltpu.VMEM((k, d), jnp.float32),
                        pltpu.VMEM((k, d), jnp.float32)],
        compiler_params=pltpu.CompilerParams(
            dimension_semantics=("arbitrary",),
            vmem_limit_bytes=_VMEM_LIMIT),
    )(phixT, feat_x.astype(jnp.float32), phiyT, feat_y.astype(jnp.float32))
    return (grams[:, 0 * k:1 * k], grams[:, 1 * k:2 * k],
            grams[:, 2 * k:3 * k], grams[:, 3 * k:4 * k])


def _resolvent_mask(evals1, evals2, gamma):
    """D[i, j] = resolvent mask, rows indexed by evals2, cols by evals1."""
    scale = jnp.maximum(jnp.maximum(jnp.max(evals1), jnp.max(evals2)), 1e-8)
    e1 = (evals1 / scale) ** gamma
    e2 = (evals2 / scale) ** gamma
    g1 = e1[None, :]
    g2 = e2[:, None]
    m_re = g2 / (g2 ** 2 + 1.0) - g1 / (g1 ** 2 + 1.0)
    m_im = 1.0 / (g2 ** 2 + 1.0) - 1.0 / (g1 ** 2 + 1.0)
    return m_re ** 2 + m_im ** 2


def _solve_fmap(mmt, nmt, dmask, lam):
    """C[i, :] = inv(M M^T + lam * diag(D[i, :])) @ (N M^T)[i, :]."""
    k = mmt.shape[0]
    eyek = jnp.eye(k, dtype=mmt.dtype)
    lhs = mmt[None, :, :] + lam * (dmask[:, :, None] * eyek[None, :, :])    # [K,K,K]
    # TODO(synk): the K small KxK torch.inverse solves have no clean Pallas
    # equivalent; solved with jnp.linalg.solve in glue.
    return jax.vmap(jnp.linalg.solve)(lhs, nmt)                             # [K, K]


# ----------------------------------------------------------------------------
# Kernel 4: SURFMNetLoss (bijectivity / orthogonality / laplacian terms)
#   3 trimmed inputs, one packed (1, 3) output = [bij, orth, lap].
# ----------------------------------------------------------------------------
def _surfmnet_loss_kernel(cxy_ref, cyx_ref, ev_ref, loss_ref):
    cxy = cxy_ref[...]                                               # [K, K]
    cyx = cyx_ref[...]
    ev = ev_ref[...]                                                 # [2, K]
    ex_row = ev[0:1, :]                                              # [1, K]
    ey_row = ev[1:2, :]

    k = cxy.shape[0]
    r = jax.lax.broadcasted_iota(jnp.int32, (k, k), 0)
    c = jax.lax.broadcasted_iota(jnp.int32, (k, k), 1)
    eye = (r == c).astype(jnp.float32)
    # column broadcasts built in-kernel from the row vectors (no extra DMAs,
    # no transpose: row-reduce of diag(ev)).
    ex_col = jnp.sum(eye * ex_row, axis=1, keepdims=True)            # [K, 1]
    ey_col = jnp.sum(eye * ey_row, axis=1, keepdims=True)

    # Bijectivity: ||Cxy Cyx - I||_F^2 + ||Cyx Cxy - I||_F^2
    m1 = jnp.dot(cxy, cyx, preferred_element_type=jnp.float32)
    m2 = jnp.dot(cyx, cxy, preferred_element_type=jnp.float32)
    bij = (jnp.sum((m1 - eye) ** 2, keepdims=True)
           + jnp.sum((m2 - eye) ** 2, keepdims=True))

    # Orthogonality: ||Cxy^T Cxy - I||_F^2 + ||Cyx^T Cyx - I||_F^2
    dn_t = (((0,), (0,)), ((), ()))
    o1 = jax.lax.dot_general(cxy, cxy, dn_t, preferred_element_type=jnp.float32)
    o2 = jax.lax.dot_general(cyx, cyx, dn_t, preferred_element_type=jnp.float32)
    orth = (jnp.sum((o1 - eye) ** 2, keepdims=True)
            + jnp.sum((o2 - eye) ** 2, keepdims=True))

    # Laplacian commutativity.
    lap1 = jnp.sum((cxy * ex_row - ey_col * cxy) ** 2, keepdims=True)
    lap2 = jnp.sum((cyx * ey_row - ex_col * cyx) ** 2, keepdims=True)
    lap = lap1 + lap2

    lane = jax.lax.broadcasted_iota(jnp.int32, (1, 3), 1)
    loss_ref[...] = (bij * (lane == 0).astype(jnp.float32)
                     + orth * (lane == 1).astype(jnp.float32)
                     + lap * (lane == 2).astype(jnp.float32))


def surfmnet_loss_terms(cxy, cyx, evals_x, evals_y):
    evs = jnp.stack([evals_x, evals_y], axis=0).astype(jnp.float32)  # [2, K]
    out = pl.pallas_call(
        _surfmnet_loss_kernel,
        out_shape=jax.ShapeDtypeStruct((1, 3), jnp.float32),
        in_specs=[_VMEM, _VMEM, _VMEM],
        out_specs=_VMEM,
    )(cxy, cyx, evs)
    return out[0, 0], out[0, 1], out[0, 2]


# ----------------------------------------------------------------------------
# Full forward pass of proj_loss_sparse
# ----------------------------------------------------------------------------
def proj_loss_sparse_forward(feat_v, feat_t, *, k_spec, knn, tile=TILE):
    # Graph construction + Laplacian spectrum for both modalities
    v_vecs, v_vals = laplacian_spectrum(feat_v, k_spec, knn, tile=tile)
    t_vecs, t_vals = laplacian_spectrum(feat_t, k_spec, knn, tile=tile)
    # (eigenpairs are treated as detached constants, like in the torch code)
    v_vecs, v_vals = jax.lax.stop_gradient(v_vecs), jax.lax.stop_gradient(v_vals)
    t_vecs, t_vals = jax.lax.stop_gradient(t_vecs), jax.lax.stop_gradient(t_vals)

    # RegularizedFMNet (bidirectional)
    aat, bat, bbt, abt = spectral_products(v_vecs, feat_v, t_vecs, feat_t)
    d_xy = _resolvent_mask(v_vals, t_vals, FM_GAMMA)
    d_yx = _resolvent_mask(t_vals, v_vals, FM_GAMMA)
    cxy = _solve_fmap(aat, bat, d_xy, FM_LAMBDA)
    cyx = _solve_fmap(bbt, abt, d_yx, FM_LAMBDA)

    # SURFMNetLoss
    bij, orth, lap = surfmnet_loss_terms(cxy, cyx, v_vals, t_vals)
    l_bij = W_BIJ * bij
    l_orth = W_ORTH * orth
    l_lap = W_LAP * lap
    return {
        "l_bij": l_bij,
        "l_orth": l_orth,
        "l_lap": l_lap,
        "l_total": l_bij + l_orth + l_lap,
    }


if __name__ == "__main__":
    # Small shapes consistent with the module's forward:
    # N graph nodes, D-dim latent features, K spectral components, kNN graph.
    N, D = 256, 64
    K_SPEC = 16
    KNN = 8

    key = jax.random.PRNGKey(0)
    k1, k2 = jax.random.split(key)
    feat_v = jax.random.normal(k1, (N, D), dtype=jnp.float32)
    feat_t = jax.random.normal(k2, (N, D), dtype=jnp.float32)

    losses = proj_loss_sparse_forward(feat_v, feat_t, k_spec=K_SPEC, knn=KNN)
    losses = jax.tree_util.tree_map(jax.block_until_ready, losses)

    assert all(bool(jnp.isfinite(v)) for v in losses.values())
    print("KERNEL_OK")
</pallas_src>

<mosaic_0001>
module attributes {stable_mosaic.version = 11 : i64} {
  func.func @kernel(%arg0: i32, %arg1: i32, %arg2: memref<1x1xf32, #tpu.memory_space<smem>>, %arg3: memref<256x64xbf16, #tpu.memory_space<vmem>>, %arg4: memref<256x1xf32, #tpu.memory_space<vmem>>, %arg5: memref<256x64xbf16, #tpu.memory_space<vmem>>, %arg6: memref<1x256xf32, #tpu.memory_space<vmem>>, %arg7: memref<256x256xf32, #tpu.memory_space<vmem>>) attributes {dimension_semantics = [#tpu.dimension_semantics<parallel>, #tpu.dimension_semantics<parallel>], iteration_bounds = array<i64: 1, 1>, scalar_prefetch = 0 : i64, scratch_operands = 0 : i64, tpu.core_type = #tpu.core_type<tc>, window_params = [{transform_indices = @transform_0, window_bounds = array<i64: 1, 1>}, {transform_indices = @transform_1, window_bounds = array<i64: 256, 64>}, {transform_indices = @transform_2, window_bounds = array<i64: 256, 1>}, {pipeline_mode = #tpu.pipeline_mode<synchronous>, transform_indices = @transform_3, window_bounds = array<i64: 256, 64>}, {pipeline_mode = #tpu.pipeline_mode<synchronous>, transform_indices = @transform_4, window_bounds = array<i64: 1, 256>}, {transform_indices = @transform_5, window_bounds = array<i64: 256, 256>}]} {
    %c0 = arith.constant 0 : index
    %c0_0 = arith.constant 0 : index
    %0 = memref.load %arg2[%c0, %c0_0] : memref<1x1xf32, #tpu.memory_space<smem>>
    %c256_i32 = arith.constant 256 : i32
    %1 = arith.muli %arg1, %c256_i32 : i32
    %2 = tpu.assume_multiple %1, 256 : i32
    %3 = arith.index_cast %2 : i32 to index
    %c0_1 = arith.constant 0 : index
    %4 = vector.load %arg5[%3, %c0_1] : memref<256x64xbf16, #tpu.memory_space<vmem>>, vector<256x64xbf16>
    %c0_2 = arith.constant 0 : index
    %5 = arith.index_cast %2 : i32 to index
    %6 = vector.load %arg6[%c0_2, %5] : memref<1x256xf32, #tpu.memory_space<vmem>>, vector<1x256xf32>
    %c0_3 = arith.constant 0 : index
    %c0_4 = arith.constant 0 : index
    %7 = vector.load %arg3[%c0_3, %c0_4] : memref<256x64xbf16, #tpu.memory_space<vmem>>, vector<256x64xbf16>
    %cst = arith.constant dense<0.000000e+00> : vector<256x256xf32>
    %8 = tpu.matmul %7, %4, %cst {dimension_numbers = #tpu.dot_dimension_numbers<[1], [1], [0], [0], [0, 0, 1, 0], [], []>} : vector<256x64xbf16>, vector<256x64xbf16>, vector<256x256xf32> -> vector<256x256xf32>
    %c0_5 = arith.constant 0 : index
    %c0_6 = arith.constant 0 : index
    %9 = vector.load %arg4[%c0_5, %c0_6] : memref<256x1xf32, #tpu.memory_space<vmem>>, vector<256x1xf32>
    %10 = vector.broadcast %9 : vector<256x1xf32> to vector<256x256xf32>
    %11 = vector.broadcast %6 : vector<1x256xf32> to vector<256x256xf32>
    %12 = arith.addf %10, %11 : vector<256x256xf32>
    %cst_7 = arith.constant 2.000000e+00 : f32
    %13 = vector.broadcast %cst_7 : f32 to vector<256x256xf32>
    %14 = arith.mulf %13, %8 : vector<256x256xf32>
    %15 = arith.subf %12, %14 : vector<256x256xf32>
    %cst_8 = arith.constant 0.000000e+00 : f32
    %16 = vector.broadcast %cst_8 : f32 to vector<256x256xf32>
    %17 = arith.maximumf %15, %16 : vector<256x256xf32>
    %18 = vector.broadcast %0 : f32 to vector<256x256xf32>
    %19 = arith.mulf %17, %18 : vector<256x256xf32>
    %20 = math.exp %19 : vector<256x256xf32>
    %21 = arith.cmpi ne, %arg0, %arg1 : i32
    %22 = arith.extui %21 : i1 to i32
    %c0_i32 = arith.constant 0 : i32
    %23 = arith.cmpi ne, %22, %c0_i32 : i32
    scf.if %23 {
      %c0_10 = arith.constant 0 : index
      %c0_11 = arith.constant 0 : index
      %27 = vector.load %arg7[%c0_10, %c0_11] : memref<256x256xf32, #tpu.memory_space<vmem>>, vector<256x256xf32>
      tpu.vector_store %arg7[%c0_10, %c0_11], %20 {strides = array<i32>} : memref<256x256xf32, #tpu.memory_space<vmem>>, vector<256x256xf32>,
    } else {
    }
    %24 = arith.cmpi eq, %arg0, %arg1 : i32
    %25 = arith.extui %24 : i1 to i32
    %c0_i32_9 = arith.constant 0 : i32
    %26 = arith.cmpi ne, %25, %c0_i32_9 : i32
    scf.if %26 {
      %27 = tpu.iota {dimensions = array<i32: 0>} : vector<256x256xi32>
      %28 = tpu.iota {dimensions = array<i32: 1>} : vector<256x256xi32>
      %29 = arith.cmpi eq, %27, %28 : vector<256x256xi32>
      %cst_10 = arith.constant 0xFF800000 : f32
      %30 = vector.broadcast %cst_10 : f32 to vector<256x256xf32>
      %31 = arith.select %29, %30, %20 : vector<256x256xi1>, vector<256x256xf32>
      %c0_11 = arith.constant 0 : index
      %c0_12 = arith.constant 0 : index
      %32 = vector.load %arg7[%c0_11, %c0_12] : memref<256x256xf32, #tpu.memory_space<vmem>>, vector<256x256xf32>
      tpu.vector_store %arg7[%c0_11, %c0_12], %31 {strides = array<i32>} : memref<256x256xf32, #tpu.memory_space<vmem>>, vector<256x256xf32>,
    } else {
    }
    return
  }
  func.func @transform_0(%arg0: i32, %arg1: i32) -> (i32, i32) {
    %c0_i32 = arith.constant 0 : i32
    %c0_i32_0 = arith.constant 0 : i32
    %c0_i32_1 = arith.constant 0 : i32
    return %c0_i32, %c0_i32_0 : i32, i32
  }
  func.func @transform_1(%arg0: i32, %arg1: i32) -> (i32, i32) {
    %c0_i32 = arith.constant 0 : i32
    %c0_i32_0 = arith.constant 0 : i32
    return %arg0, %c0_i32 : i32, i32
  }
  func.func @transform_2(%arg0: i32, %arg1: i32) -> (i32, i32) {
    %c0_i32 = arith.constant 0 : i32
    %c0_i32_0 = arith.constant 0 : i32
    return %arg0, %c0_i32 : i32, i32
  }
  func.func @transform_3(%arg0: i32, %arg1: i32) -> (i32, i32) {
    %c0_i32 = arith.constant 0 : i32
    %c0_i32_0 = arith.constant 0 : i32
    %c0_i32_1 = arith.constant 0 : i32
    return %c0_i32, %c0_i32_0 : i32, i32
  }
  func.func @transform_4(%arg0: i32, %arg1: i32) -> (i32, i32) {
    %c0_i32 = arith.constant 0 : i32
    %c0_i32_0 = arith.constant 0 : i32
    %c0_i32_1 = arith.constant 0 : i32
    return %c0_i32, %c0_i32_0 : i32, i32
  }
  func.func @transform_5(%arg0: i32, %arg1: i32) -> (i32, i32) {
    %c0_i32 = arith.constant 0 : i32
    return %arg0, %arg1 : i32, i32
  }
}

</mosaic_0001>

<llo_original>
// kernel: tpu_custom_call.1
$region0: #{tpu_custom_call.1}
  #allocation0 [shape = 'u32[]', space=smem, size = 0x4, offset = 0x4, fixed_abs, tag = 'smem constant byte address 0x4 - core index']
  #allocation1 [shape = 'u32[144,128]{1,0:T(1,128)}', space=vmem, size = 0x12000, scoped, tag = 'internal scratch']
  #allocation2 [shape = 'f32[1,1]{1,0:T(1,128)S(6)}', space=smem, size = 0x200, scoped, tag = 'scoped memory for tpu_custom_call.1']
  %s0 = inlined_call_operand.<no memory space> [shape: f32[1,1], index: 0, kind: input, shape index: {}]
  %s1 = inlined_call_operand.hbm [shape: bf16[256,64], index: 1, kind: input, shape index: {}]
  %s2 = inlined_call_operand.hbm [shape: f32[256,1], index: 2, kind: input, shape index: {}]
  %s3 = inlined_call_operand.hbm [shape: bf16[256,64], index: 3, kind: input, shape index: {}]
  %s4 = inlined_call_operand.hbm [shape: f32[1,256], index: 4, kind: input, shape index: {}]
  %s5 = inlined_call_operand.hbm [shape: f32[256,256], index: 5, kind: output, shape index: {}]
  %s6 = sld [smem:[#allocation0]]
  $region54: #{tpu_custom_call.1} parent=0
    _
  %s8 = ssub.s32 1, %s6
  %s9 = scalar_select 0, %s8, %s6
  %10 = sst [smem:[#allocation2]] %s0
  $region1: #{tpu_custom_call.1} parent=0
    #allocation3 [shape = 'u8[65536]{0}', space=vmem, size = 0x10000, scoped, tag = 'input window, operand 1, single buffered']
    #allocation4 [shape = 's32[1]{0}', space=sflag, size = 0x4, scoped, tag = 'scoped memory for tpu_custom_call.1']
    #allocation5 [shape = 's32[1]{0}', space=sflag, size = 0x4, scoped, tag = 'scoped memory for tpu_custom_call.1']
    #allocation6 [shape = 'u8[131072]{0}', space=vmem, size = 0x20000, scoped, tag = 'input window, operand 2, single buffered']
    #allocation7 [shape = 's32[1]{0}', space=sflag, size = 0x4, scoped, tag = 'scoped memory for tpu_custom_call.1']
    #allocation8 [shape = 'u8[65536]{0}', space=vmem, size = 0x10000, scoped, tag = 'input window, operand 3, single buffered']
    #allocation9 [shape = 'u8[1024]{0}', space=vmem, size = 0x400, scoped, tag = 'input window, operand 4, single buffered']
    #allocation10 [shape = 's32[1]{0}', space=sflag, size = 0x4, scoped, tag = 'scoped memory for tpu_custom_call.1']
    #allocation11 [shape = 'u8[262144]{0}', space=vmem, size = 0x40000, scoped, tag = 'output window, operand 0, single buffered']
    %11 = vsyncpa [#allocation4], 0
    %12 = vsyncpa [#allocation7], 0
    %13 = vsyncpa [#allocation10], 0
    %14 = vsyncpa [#allocation5], 0
    // Predicated region
    $region2: #{tpu_custom_call.1} parent=1 // pred_check
      _
    $region3: #{tpu_custom_call.1} parent=1 // pred_check_branch
      %16 = sbr.rel (0) target = $region5
    $region4: #{tpu_custom_call.1} parent=1 // pred_region
      _
    $region5: #{tpu_custom_call.1} parent=1 // pred_fallthru
      _
    // Predicated region
    $region6: #{tpu_custom_call.1} parent=1 // pred_check
      _
    $region7: #{tpu_custom_call.1} parent=1 // pred_check_branch
      %18 = sbr.rel (0) target = $region9
    $region8: #{tpu_custom_call.1} parent=1 // pred_region
      %s20 = ssub.s32 2048, 2048
      %21 = vsyncadd [#allocation4], %s20
      %s22 = sshll.u32 [#allocation3], 4
      %s23 = int_to_ptr.vmem [resolvable:$true] %s22
      %28 = dma.hbm_to_vmem [thread:$0]  %s1, 2048, %s23, [#allocation4], 64, 64, 4
    $region9: #{tpu_custom_call.1} parent=1 // pred_fallthru
      _
    // Predicated region
    $region10: #{tpu_custom_call.1} parent=1 // pred_check
      _
    $region11: #{tpu_custom_call.1} parent=1 // pred_check_branch
      %30 = sbr.rel (0) target = $region13
    $region12: #{tpu_custom_call.1} parent=1 // pred_region
      %s32 = ssub.s32 4096, 4096
      %33 = vsyncadd [#allocation7], %s32
      %s34 = sshll.u32 [#allocation6], 4
      %s35 = int_to_ptr.vmem [resolvable:$true] %s34
      %40 = dma.hbm_to_vmem [thread:$0]  %s2, 4096, %s35, [#allocation7], 128, 128, 8
    $region13: #{tpu_custom_call.1} parent=1 // pred_fallthru
      _
    // Predicated region
    $region14: #{tpu_custom_call.1} parent=1 // pred_check
      _
    $region15: #{tpu_custom_call.1} parent=1 // pred_check_branch
      %42 = sbr.rel (0) target = $region17
    $region16: #{tpu_custom_call.1} parent=1 // pred_region
      %s44 = ssub.s32 2048, 2048
      %45 = vsyncadd [#allocation7], %s44
      %s46 = sshll.u32 [#allocation8], 4
      %s47 = int_to_ptr.vmem [resolvable:$true] %s46
      %52 = dma.hbm_to_vmem [thread:$0]  %s3, 2048, %s47, [#allocation7], 64, 64, 4
    $region17: #{tpu_custom_call.1} parent=1 // pred_fallthru
      _
    // Predicated region
    $region18: #{tpu_custom_call.1} parent=1 // pred_check
      _
    $region19: #{tpu_custom_call.1} parent=1 // pred_check_branch
      %54 = sbr.rel (0) target = $region21
    $region20: #{tpu_custom_call.1} parent=1 // pred_region
      %s56 = ssub.s32 32, 32
      %57 = vsyncadd [#allocation10], %s56
      %s59 = sshll.u32 [#allocation9], 4
      %s60 = int_to_ptr.vmem [resolvable:$true] %s59
      %62 = dma.hbm_to_vmem [thread:$0]  %s4, 32, %s60, [#allocation10]
    $region21: #{tpu_custom_call.1} parent=1 // pred_fallthru
      _
    // Predicated region
    $region22: #{tpu_custom_call.1} parent=1 // pred_check
      _
    $region23: #{tpu_custom_call.1} parent=1 // pred_check_branch
      %64 = sbr.rel (0) target = $region25
    $region24: #{tpu_custom_call.1} parent=1 // pred_region
      %65 = dma.done [#allocation4], 2048
    $region25: #{tpu_custom_call.1} parent=1 // pred_fallthru
      _
    // Predicated region
    $region26: #{tpu_custom_call.1} parent=1 // pred_check
      _
    $region27: #{tpu_custom_call.1} parent=1 // pred_check_branch
      %67 = sbr.rel (0) target = $region29
    $region28: #{tpu_custom_call.1} parent=1 // pred_region
      %68 = dma.done [#allocation7], 4096
    $region29: #{tpu_custom_call.1} parent=1 // pred_fallthru
      _
    // Predicated region
    $region30: #{tpu_custom_call.1} parent=1 // pred_check
      _
    $region31: #{tpu_custom_call.1} parent=1 // pred_check_branch
      %70 = sbr.rel (0) target = $region33
    $region32: #{tpu_custom_call.1} parent=1 // pred_region
      %71 = dma.done [#allocation7], 2048
    $region33: #{tpu_custom_call.1} parent=1 // pred_fallthru
      _
    // Predicated region
    $region34: #{tpu_custom_call.1} parent=1 // pred_check
      _
    $region35: #{tpu_custom_call.1} parent=1 // pred_check_branch
      %73 = sbr.rel (0) target = $region37
    $region36: #{tpu_custom_call.1} parent=1 // pred_region
      %74 = dma.done [#allocation10], 32
    $region37: #{tpu_custom_call.1} parent=1 // pred_fallthru
      _
    %s76 = sld [smem:[#allocation2]]
    %s77 = smul.u32 0, 256
    %s78 = sshra.s32 %s77, 3
    %s79 = sand.u32 %s77, 7
    %s80 = smul.addr %s78, 4
    %s81 = scalar_lea.vmem [#allocation8], %s80
    %v82 = vld [vmem:[%s81] sm:$0xf]
    %v83 = vld [vmem:[%s81 + $0x4] sm:$0xf]
    %v84 = vld [vmem:[%s81 + $0x8] sm:$0xf]
    %v85 = vld [vmem:[%s81 + $0xc] sm:$0xf]
    %v86 = vld [vmem:[%s81 + $0x10] sm:$0xf]
    %v87 = vld [vmem:[%s81 + $0x14] sm:$0xf]
    %v88 = vld [vmem:[%s81 + $0x18] sm:$0xf]
    %v89 = vld [vmem:[%s81 + $0x1c] sm:$0xf]
    %v90 = vld [vmem:[%s81 + $0x20] sm:$0xf]
    %v91 = vld [vmem:[%s81 + $0x24] sm:$0xf]
    %v92 = vld [vmem:[%s81 + $0x28] sm:$0xf]
    %v93 = vld [vmem:[%s81 + $0x2c] sm:$0xf]
    %v94 = vld [vmem:[%s81 + $0x30] sm:$0xf]
    %v95 = vld [vmem:[%s81 + $0x34] sm:$0xf]
    %v96 = vld [vmem:[%s81 + $0x38] sm:$0xf]
    %v97 = vld [vmem:[%s81 + $0x3c] sm:$0xf]
    %v98 = vld [vmem:[%s81 + $0x40] sm:$0xf]
    %v99 = vld [vmem:[%s81 + $0x44] sm:$0xf]
    %v100 = vld [vmem:[%s81 + $0x48] sm:$0xf]
    %v101 = vld [vmem:[%s81 + $0x4c] sm:$0xf]
    %v102 = vld [vmem:[%s81 + $0x50] sm:$0xf]
    %v103 = vld [vmem:[%s81 + $0x54] sm:$0xf]
    %v104 = vld [vmem:[%s81 + $0x58] sm:$0xf]
    %v105 = vld [vmem:[%s81 + $0x5c] sm:$0xf]
    %v106 = vld [vmem:[%s81 + $0x60] sm:$0xf]
    %v107 = vld [vmem:[%s81 + $0x64] sm:$0xf]
    %v108 = vld [vmem:[%s81 + $0x68] sm:$0xf]
    %v109 = vld [vmem:[%s81 + $0x6c] sm:$0xf]
    %v110 = vld [vmem:[%s81 + $0x70] sm:$0xf]
    %v111 = vld [vmem:[%s81 + $0x74] sm:$0xf]
    %v112 = vld [vmem:[%s81 + $0x78] sm:$0xf]
    %v113 = vld [vmem:[%s81 + $0x7c] sm:$0xf]
    %s114 = sshra.s32 %s77, 7
    %s115 = sand.u32 %s77, 127
    %s116 = scalar_lea.vmem [#allocation9], %s114
    %v117 = vld [vmem:[%s116] sm:$0x3]
    %v118 = vld [vmem:[#allocation3] sm:$0xf]
    %v119 = vld [vmem:[#allocation3 + $0x4] sm:$0xf]
    %v120 = vld [vmem:[#allocation3 + $0x8] sm:$0xf]
    %v121 = vld [vmem:[#allocation3 + $0xc] sm:$0xf]
    %v122 = vld [vmem:[#allocation3 + $0x10] sm:$0xf]
    %v123 = vld [vmem:[#allocation3 + $0x14] sm:$0xf]
    %v124 = vld [vmem:[#allocation3 + $0x18] sm:$0xf]
    %v125 = vld [vmem:[#allocation3 + $0x1c] sm:$0xf]
    %v126 = vld [vmem:[#allocation3 + $0x20] sm:$0xf]
    %v127 = vld [vmem:[#allocation3 + $0x24] sm:$0xf]
    %v128 = vld [vmem:[#allocation3 + $0x28] sm:$0xf]
    %v129 = vld [vmem:[#allocation3 + $0x2c] sm:$0xf]
    %v130 = vld [vmem:[#allocation3 + $0x30] sm:$0xf]
    %v131 = vld [vmem:[#allocation3 + $0x34] sm:$0xf]
    %v132 = vld [vmem:[#allocation3 + $0x38] sm:$0xf]
    %v133 = vld [vmem:[#allocation3 + $0x3c] sm:$0xf]
    %v134 = vld [vmem:[#allocation3 + $0x40] sm:$0xf]
    %v135 = vld [vmem:[#allocation3 + $0x44] sm:$0xf]
    %v136 = vld [vmem:[#allocation3 + $0x48] sm:$0xf]
    %v137 = vld [vmem:[#allocation3 + $0x4c] sm:$0xf]
    %v138 = vld [vmem:[#allocation3 + $0x50] sm:$0xf]
    %v139 = vld [vmem:[#allocation3 + $0x54] sm:$0xf]
    %v140 = vld [vmem:[#allocation3 + $0x58] sm:$0xf]
    %v141 = vld [vmem:[#allocation3 + $0x5c] sm:$0xf]
    %v142 = vld [vmem:[#allocation3 + $0x60] sm:$0xf]
    %v143 = vld [vmem:[#allocation3 + $0x64] sm:$0xf]
    %v144 = vld [vmem:[#allocation3 + $0x68] sm:$0xf]
    %v145 = vld [vmem:[#allocation3 + $0x6c] sm:$0xf]
    %v146 = vld [vmem:[#allocation3 + $0x70] sm:$0xf]
    %v147 = vld [vmem:[#allocation3 + $0x74] sm:$0xf]
    %v148 = vld [vmem:[#allocation3 + $0x78] sm:$0xf]
    %v149 = vld [vmem:[#allocation3 + $0x7c] sm:$0xf]
    %v182 = vunpack.c.l.b16 %v118
    %v183 = vunpack.c.l.b16 %v119
    %v184 = vunpack.c.l.b16 %v120
    %v185 = vunpack.c.l.b16 %v121
    %v186 = vunpack.c.l.b16 %v122
    %v187 = vunpack.c.l.b16 %v123
    %v188 = vunpack.c.l.b16 %v124
    %v189 = vunpack.c.l.b16 %v125
    %v190 = vunpack.c.l.b16 %v126
    %v191 = vunpack.c.l.b16 %v127
    %v192 = vunpack.c.l.b16 %v128
    %v193 = vunpack.c.l.b16 %v129
    %v194 = vunpack.c.l.b16 %v130
    %v195 = vunpack.c.l.b16 %v131
    %v196 = vunpack.c.l.b16 %v132
    %v197 = vunpack.c.l.b16 %v133
    %v198 = vunpack.c.l.b16 %v134
    %v199 = vunpack.c.l.b16 %v135
    %v200 = vunpack.c.l.b16 %v136
    %v201 = vunpack.c.l.b16 %v137
    %v202 = vunpack.c.l.b16 %v138
    %v203 = vunpack.c.l.b16 %v139
    %v204 = vunpack.c.l.b16 %v140
    %v205 = vunpack.c.l.b16 %v141
    %v206 = vunpack.c.l.b16 %v142
    %v207 = vunpack.c.l.b16 %v143
    %v208 = vunpack.c.l.b16 %v144
    %v209 = vunpack.c.l.b16 %v145
    %v210 = vunpack.c.l.b16 %v146
    %v211 = vunpack.c.l.b16 %v147
    %v212 = vunpack.c.l.b16 %v148
    %v213 = vunpack.c.l.b16 %v149
    %v214 = vpack.c.b16 %v183, %v182
    %v215 = vpack.c.b16 %v185, %v184
    %v216 = vpack.c.b16 %v187, %v186
    %v217 = vpack.c.b16 %v189, %v188
    %v218 = vpack.c.b16 %v191, %v190
    %v219 = vpack.c.b16 %v193, %v192
    %v220 = vpack.c.b16 %v195, %v194
    %v221 = vpack.c.b16 %v197, %v196
    %v222 = vpack.c.b16 %v199, %v198
    %v223 = vpack.c.b16 %v201, %v200
    %v224 = vpack.c.b16 %v203, %v202
    %v225 = vpack.c.b16 %v205, %v204
    %v226 = vpack.c.b16 %v207, %v206
    %v227 = vpack.c.b16 %v209, %v208
    %v228 = vpack.c.b16 %v211, %v210
    %v229 = vpack.c.b16 %v213, %v212
    %v262 = vunpack.c.l.b16 %v82
    %v263 = vunpack.c.l.b16 %v83
    %v264 = vunpack.c.l.b16 %v84
    %v265 = vunpack.c.l.b16 %v85
    %v266 = vunpack.c.l.b16 %v86
    %v267 = vunpack.c.l.b16 %v87
    %v268 = vunpack.c.l.b16 %v88
    %v269 = vunpack.c.l.b16 %v89
    %v270 = vunpack.c.l.b16 %v90
    %v271 = vunpack.c.l.b16 %v91
    %v272 = vunpack.c.l.b16 %v92
    %v273 = vunpack.c.l.b16 %v93
    %v274 = vunpack.c.l.b16 %v94
    %v275 = vunpack.c.l.b16 %v95
    %v276 = vunpack.c.l.b16 %v96
    %v277 = vunpack.c.l.b16 %v97
    %v278 = vunpack.c.l.b16 %v98
    %v279 = vunpack.c.l.b16 %v99
    %v280 = vunpack.c.l.b16 %v100
    %v281 = vunpack.c.l.b16 %v101
    %v282 = vunpack.c.l.b16 %v102
    %v283 = vunpack.c.l.b16 %v103
    %v284 = vunpack.c.l.b16 %v104
    %v285 = vunpack.c.l.b16 %v105
    %v286 = vunpack.c.l.b16 %v106
    %v287 = vunpack.c.l.b16 %v107
    %v288 = vunpack.c.l.b16 %v108
    %v289 = vunpack.c.l.b16 %v109
    %v290 = vunpack.c.l.b16 %v110
    %v291 = vunpack.c.l.b16 %v111
    %v292 = vunpack.c.l.b16 %v112
    %v293 = vunpack.c.l.b16 %v113
    %v294 = vpack.c.b16 %v263, %v262
    %v295 = vpack.c.b16 %v265, %v264
    %v296 = vpack.c.b16 %v267, %v266
    %v297 = vpack.c.b16 %v269, %v268
    %v298 = vpack.c.b16 %v271, %v270
    %v299 = vpack.c.b16 %v273, %v272
    %v300 = vpack.c.b16 %v275, %v274
    %v301 = vpack.c.b16 %v277, %v276
    %v302 = vpack.c.b16 %v279, %v278
    %v303 = vpack.c.b16 %v281, %v280
    %v304 = vpack.c.b16 %v283, %v282
    %v305 = vpack.c.b16 %v285, %v284
    %v306 = vpack.c.b16 %v287, %v286
    %v307 = vpack.c.b16 %v289, %v288
    %v308 = vpack.c.b16 %v291, %v290
    %v309 = vpack.c.b16 %v293, %v292
    %vm310 = vcmask 523264
    %v312 = vsel %vm310, %v214, 0
    %v315 = vsel %vm310, %v215, 0
    %v318 = vsel %vm310, %v216, 0
    %v321 = vsel %vm310, %v217, 0
    %v324 = vsel %vm310, %v218, 0
    %v327 = vsel %vm310, %v219, 0
    %v330 = vsel %vm310, %v220, 0
    %v333 = vsel %vm310, %v221, 0
    %v336 = vsel %vm310, %v222, 0
    %v339 = vsel %vm310, %v223, 0
    %v342 = vsel %vm310, %v224, 0
    %v345 = vsel %vm310, %v225, 0
    %v348 = vsel %vm310, %v226, 0
    %v351 = vsel %vm310, %v227, 0
    %v354 = vsel %vm310, %v228, 0
    %v357 = vsel %vm310, %v229, 0
    %v360 = vsel %vm310, %v294, 0
    %v363 = vsel %vm310, %v295, 0
    %v366 = vsel %vm310, %v296, 0
    %v369 = vsel %vm310, %v297, 0
    %v372 = vsel %vm310, %v298, 0
    %v375 = vsel %vm310, %v299, 0
    %v378 = vsel %vm310, %v300, 0
    %v381 = vsel %vm310, %v301, 0
    %v384 = vsel %vm310, %v302, 0
    %v387 = vsel %vm310, %v303, 0
    %v390 = vsel %vm310, %v304, 0
    %v393 = vsel %vm310, %v305, 0
    %v396 = vsel %vm310, %v306, 0
    %v399 = vsel %vm310, %v307, 0
    %v402 = vsel %vm310, %v308, 0
    %v405 = vsel %vm310, %v309, 0
    %407 = vmatprep.subr.bf16.mxu0 0
    %408 = vmatpush1.bf16.xpose.msra.mxu0 %v360
    %409 = vmatprep.subr.bf16.mxu0 0
    %410 = vmatpush1.bf16.xpose.msra.mxu0 %v363
    %411 = vmatprep.subr.bf16.mxu0 0
    %412 = vmatpush1.bf16.xpose.msra.mxu0 %v366
    %413 = vmatprep.subr.bf16.mxu0 0
    %414 = vmatpush1.bf16.xpose.msra.mxu0 %v369
    %415 = vmatprep.subr.bf16.mxu0 0
    %416 = vmatpush1.bf16.xpose.msra.mxu0 %v372
    %417 = vmatprep.subr.bf16.mxu0 0
    %418 = vmatpush1.bf16.xpose.msra.mxu0 %v375
    %419 = vmatprep.subr.bf16.mxu0 0
    %420 = vmatpush1.bf16.xpose.msra.mxu0 %v378
    %421 = vmatprep.subr.bf16.mxu0 0
    %422 = vmatpush1.bf16.xpose.msra.mxu0 %v381
    %423 = vmatprep.subr.bf16.mxu0 0
    %424 = vmatpush1.bf16.xpose.msra.mxu0 %v384
    %425 = vmatprep.subr.bf16.mxu0 0
    %426 = vmatpush1.bf16.xpose.msra.mxu0 %v387
    %427 = vmatprep.subr.bf16.mxu0 0
    %428 = vmatpush1.bf16.xpose.msra.mxu0 %v390
    %429 = vmatprep.subr.bf16.mxu0 0
    %430 = vmatpush1.bf16.xpose.msra.mxu0 %v393
    %431 = vmatprep.subr.bf16.mxu0 0
    %432 = vmatpush1.bf16.xpose.msra.mxu0 %v396
    %433 = vmatprep.subr.bf16.mxu0 0
    %434 = vmatpush1.bf16.xpose.msra.mxu0 %v399
    %435 = vmatprep.subr.bf16.mxu0 0
    %436 = vmatpush1.bf16.xpose.msra.mxu0 %v402
    %437 = vmatprep.subr.bf16.mxu0 0
    %438 = vmatpush1.bf16.xpose.msra.mxu0 %v405
    %439 = vmatprep.mubr.bf16.mxu0 0
    %440 = vmatmul.mubr.bf16.gmra.mrb[0].mxu0 %v312
    %v441 = vpop.f32.mrb[0].mxu0
    %v442 = vadd.f32 0.0, %v441
    %v443 = vpop.f32.mrb[0].mxu0
    %v444 = vadd.f32 0.0, %v443
    %v445 = vpop.f32.mrb[0].mxu0
    %v446 = vadd.f32 0.0, %v445
    %v447 = vpop.f32.mrb[0].mxu0
    %v448 = vadd.f32 0.0, %v447
    %449 = vmatprep.mubr.bf16.mxu0 0
    %450 = vmatmul.mubr.bf16.gmra.mrb[0].mxu0 %v315
    %v451 = vpop.f32.mrb[0].mxu0
    %v452 = vadd.f32 0.0, %v451
    %v453 = vpop.f32.mrb[0].mxu0
    %v454 = vadd.f32 0.0, %v453
    %v455 = vpop.f32.mrb[0].mxu0
    %v456 = vadd.f32 0.0, %v455
    %v457 = vpop.f32.mrb[0].mxu0
    %v458 = vadd.f32 0.0, %v457
    %459 = vmatprep.mubr.bf16.mxu0 0
    %460 = vmatmul.mubr.bf16.gmra.mrb[0].mxu0 %v318
    %v461 = vpop.f32.mrb[0].mxu0
    %v462 = vadd.f32 0.0, %v461
    %v463 = vpop.f32.mrb[0].mxu0
    %v464 = vadd.f32 0.0, %v463
    %v465 = vpop.f32.mrb[0].mxu0
    %v466 = vadd.f32 0.0, %v465
    %v467 = vpop.f32.mrb[0].mxu0
    %v468 = vadd.f32 0.0, %v467
    %469 = vmatprep.mubr.bf16.mxu0 0
    %470 = vmatmul.mubr.bf16.gmra.mrb[0].mxu0 %v321
    %v471 = vpop.f32.mrb[0].mxu0
    %v472 = vadd.f32 0.0, %v471
    %v473 = vpop.f32.mrb[0].mxu0
    %v474 = vadd.f32 0.0, %v473
    %v475 = vpop.f32.mrb[0].mxu0
    %v476 = vadd.f32 0.0, %v475
    %v477 = vpop.f32.mrb[0].mxu0
    %v478 = vadd.f32 0.0, %v477
    %479 = vmatprep.mubr.bf16.mxu0 0
    %480 = vmatmul.mubr.bf16.gmra.mrb[0].mxu0 %v324
    %v481 = vpop.f32.mrb[0].mxu0
    %v482 = vadd.f32 0.0, %v481
    %v483 = vpop.f32.mrb[0].mxu0
    %v484 = vadd.f32 0.0, %v483
    %v485 = vpop.f32.mrb[0].mxu0
    %v486 = vadd.f32 0.0, %v485
    %v487 = vpop.f32.mrb[0].mxu0
    %v488 = vadd.f32 0.0, %v487
    %489 = vmatprep.mubr.bf16.mxu0 0
    %490 = vmatmul.mubr.bf16.gmra.mrb[0].mxu0 %v327
    %v491 = vpop.f32.mrb[0].mxu0
    %v492 = vadd.f32 0.0, %v491
    %v493 = vpop.f32.mrb[0].mxu0
    %v494 = vadd.f32 0.0, %v493
    %v495 = vpop.f32.mrb[0].mxu0
    %v496 = vadd.f32 0.0, %v495
    %v497 = vpop.f32.mrb[0].mxu0
    %v498 = vadd.f32 0.0, %v497
    %499 = vmatprep.mubr.bf16.mxu0 0
    %500 = vmatmul.mubr.bf16.gmra.mrb[0].mxu0 %v330
    %v501 = vpop.f32.mrb[0].mxu0
    %v502 = vadd.f32 0.0, %v501
    %v503 = vpop.f32.mrb[0].mxu0
    %v504 = vadd.f32 0.0, %v503
    %v505 = vpop.f32.mrb[0].mxu0
    %v506 = vadd.f32 0.0, %v505
    %v507 = vpop.f32.mrb[0].mxu0
    %v508 = vadd.f32 0.0, %v507
    %509 = vmatprep.mubr.bf16.mxu0 0
    %510 = vmatmul.mubr.bf16.gmra.mrb[0].mxu0 %v333
    %v511 = vpop.f32.mrb[0].mxu0
    %v512 = vadd.f32 0.0, %v511
    %v513 = vpop.f32.mrb[0].mxu0
    %v514 = vadd.f32 0.0, %v513
    %v515 = vpop.f32.mrb[0].mxu0
    %v516 = vadd.f32 0.0, %v515
    %v517 = vpop.f32.mrb[0].mxu0
    %v518 = vadd.f32 0.0, %v517
    %519 = vmatprep.mubr.bf16.mxu0 0
    %520 = vmatmul.mubr.bf16.gmra.mrb[0].mxu0 %v336
    %v521 = vpop.f32.mrb[0].mxu0
    %v522 = vadd.f32 0.0, %v521
    %v523 = vpop.f32.mrb[0].mxu0
    %v524 = vadd.f32 0.0, %v523
    %v525 = vpop.f32.mrb[0].mxu0
    %v526 = vadd.f32 0.0, %v525
    %v527 = vpop.f32.mrb[0].mxu0
    %v528 = vadd.f32 0.0, %v527
    %529 = vmatprep.mubr.bf16.mxu0 0
    %530 = vmatmul.mubr.bf16.gmra.mrb[0].mxu0 %v339
    %v531 = vpop.f32.mrb[0].mxu0
    %v532 = vadd.f32 0.0, %v531
    %v533 = vpop.f32.mrb[0].mxu0
    %v534 = vadd.f32 0.0, %v533
    %v535 = vpop.f32.mrb[0].mxu0
    %v536 = vadd.f32 0.0, %v535
    %v537 = vpop.f32.mrb[0].mxu0
    %v538 = vadd.f32 0.0, %v537
    %539 = vmatprep.mubr.bf16.mxu0 0
    %540 = vmatmul.mubr.bf16.gmra.mrb[0].mxu0 %v342
    %v541 = vpop.f32.mrb[0].mxu0
    %v542 = vadd.f32 0.0, %v541
    %v543 = vpop.f32.mrb[0].mxu0
    %v544 = vadd.f32 0.0, %v543
    %v545 = vpop.f32.mrb[0].mxu0
    %v546 = vadd.f32 0.0, %v545
    %v547 = vpop.f32.mrb[0].mxu0
    %v548 = vadd.f32 0.0, %v547
    %549 = vmatprep.mubr.bf16.mxu0 0
    %550 = vmatmul.mubr.bf16.gmra.mrb[0].mxu0 %v345
    %v551 = vpop.f32.mrb[0].mxu0
    %v552 = vadd.f32 0.0, %v551
    %v553 = vpop.f32.mrb[0].mxu0
    %v554 = vadd.f32 0.0, %v553
    %v555 = vpop.f32.mrb[0].mxu0
    %v556 = vadd.f32 0.0, %v555
    %v557 = vpop.f32.mrb[0].mxu0
    %v558 = vadd.f32 0.0, %v557
    %559 = vmatprep.mubr.bf16.mxu0 0
    %560 = vmatmul.mubr.bf16.gmra.mrb[0].mxu0 %v348
    %v561 = vpop.f32.mrb[0].mxu0
    %v562 = vadd.f32 0.0, %v561
    %v563 = vpop.f32.mrb[0].mxu0
    %v564 = vadd.f32 0.0, %v563
    %v565 = vpop.f32.mrb[0].mxu0
    %v566 = vadd.f32 0.0, %v565
    %v567 = vpop.f32.mrb[0].mxu0
    %v568 = vadd.f32 0.0, %v567
    %569 = vmatprep.mubr.bf16.mxu0 0
    %570 = vmatmul.mubr.bf16.gmra.mrb[0].mxu0 %v351
    %v571 = vpop.f32.mrb[0].mxu0
    %v572 = vadd.f32 0.0, %v571
    %v573 = vpop.f32.mrb[0].mxu0
    %v574 = vadd.f32 0.0, %v573
    %v575 = vpop.f32.mrb[0].mxu0
    %v576 = vadd.f32 0.0, %v575
    %v577 = vpop.f32.mrb[0].mxu0
    %v578 = vadd.f32 0.0, %v577
    %579 = vmatprep.mubr.bf16.mxu0 0
    %580 = vmatmul.mubr.bf16.gmra.mrb[0].mxu0 %v354
    %v581 = vpop.f32.mrb[0].mxu0
    %v582 = vadd.f32 0.0, %v581
    %v583 = vpop.f32.mrb[0].mxu0
    %v584 = vadd.f32 0.0, %v583
    %v585 = vpop.f32.mrb[0].mxu0
    %v586 = vadd.f32 0.0, %v585
    %v587 = vpop.f32.mrb[0].mxu0
    %v588 = vadd.f32 0.0, %v587
    %589 = vmatprep.mubr.bf16.mxu0 0
    %590 = vmatmul.mubr.bf16.gmra.mrb[0].mxu0 %v357
    %v591 = vpop.f32.mrb[0].mxu0
    %v592 = vadd.f32 0.0, %v591
    %v593 = vpop.f32.mrb[0].mxu0
    %v594 = vadd.f32 0.0, %v593
    %v595 = vpop.f32.mrb[0].mxu0
    %v596 = vadd.f32 0.0, %v595
    %v597 = vpop.f32.mrb[0].mxu0
    %v598 = vadd.f32 0.0, %v597
    %599 = vdwg.mxu0
    %v600 = vld [vmem:[#allocation6] sm:$0xff]
    %v601 = vld [vmem:[#allocation6 + $0x8] sm:$0xff]
    %v602 = vld [vmem:[#allocation6 + $0x10] sm:$0xff]
    %v603 = vld [vmem:[#allocation6 + $0x18] sm:$0xff]
    %v604 = vld [vmem:[#allocation6 + $0x20] sm:$0xff]
    %v605 = vld [vmem:[#allocation6 + $0x28] sm:$0xff]
    %v606 = vld [vmem:[#allocation6 + $0x30] sm:$0xff]
    %v607 = vld [vmem:[#allocation6 + $0x38] sm:$0xff]
    %v608 = vld [vmem:[#allocation6 + $0x40] sm:$0xff]
    %v609 = vld [vmem:[#allocation6 + $0x48] sm:$0xff]
    %v610 = vld [vmem:[#allocation6 + $0x50] sm:$0xff]
    %v611 = vld [vmem:[#allocation6 + $0x58] sm:$0xff]
    %v612 = vld [vmem:[#allocation6 + $0x60] sm:$0xff]
    %v613 = vld [vmem:[#allocation6 + $0x68] sm:$0xff]
    %v614 = vld [vmem:[#allocation6 + $0x70] sm:$0xff]
    %v615 = vld [vmem:[#allocation6 + $0x78] sm:$0xff]
    %v616 = vld [vmem:[#allocation6 + $0x80] sm:$0xff]
    %v617 = vld [vmem:[#allocation6 + $0x88] sm:$0xff]
    %v618 = vld [vmem:[#allocation6 + $0x90] sm:$0xff]
    %v619 = vld [vmem:[#allocation6 + $0x98] sm:$0xff]
    %v620 = vld [vmem:[#allocation6 + $0xa0] sm:$0xff]
    %v621 = vld [vmem:[#allocation6 + $0xa8] sm:$0xff]
    %v622 = vld [vmem:[#allocation6 + $0xb0] sm:$0xff]
    %v623 = vld [vmem:[#allocation6 + $0xb8] sm:$0xff]
    %v624 = vld [vmem:[#allocation6 + $0xc0] sm:$0xff]
    %v625 = vld [vmem:[#allocation6 + $0xc8] sm:$0xff]
    %v626 = vld [vmem:[#allocation6 + $0xd0] sm:$0xff]
    %v627 = vld [vmem:[#allocation6 + $0xd8] sm:$0xff]
    %v628 = vld [vmem:[#allocation6 + $0xe0] sm:$0xff]
    %v629 = vld [vmem:[#allocation6 + $0xe8] sm:$0xff]
    %v630 = vld [vmem:[#allocation6 + $0xf0] sm:$0xff]
    %v631 = vld [vmem:[#allocation6 + $0xf8] sm:$0xff]
    %633 = vset.pattern.permute.xlu0 0
    %634 = vperm.xlu0 %633, %v600
    %v635 = vpop.permute.xlu0 %634
    %638 = vset.pattern.permute.xlu0 0
    %639 = vperm.xlu0 %638, %v601
    %v640 = vpop.permute.xlu0 %639
    %643 = vset.pattern.permute.xlu0 0
    %644 = vperm.xlu0 %643, %v602
    %v645 = vpop.permute.xlu0 %644
    %648 = vset.pattern.permute.xlu0 0
    %649 = vperm.xlu0 %648, %v603
    %v650 = vpop.permute.xlu0 %649
    %653 = vset.pattern.permute.xlu0 0
    %654 = vperm.xlu0 %653, %v604
    %v655 = vpop.permute.xlu0 %654
    %658 = vset.pattern.permute.xlu0 0
    %659 = vperm.xlu0 %658, %v605
    %v660 = vpop.permute.xlu0 %659
    %663 = vset.pattern.permute.xlu0 0
    %664 = vperm.xlu0 %663, %v606
    %v665 = vpop.permute.xlu0 %664
    %668 = vset.pattern.permute.xlu0 0
    %669 = vperm.xlu0 %668, %v607
    %v670 = vpop.permute.xlu0 %669
    %673 = vset.pattern.permute.xlu0 0
    %674 = vperm.xlu0 %673, %v608
    %v675 = vpop.permute.xlu0 %674
    %678 = vset.pattern.permute.xlu0 0
    %679 = vperm.xlu0 %678, %v609
    %v680 = vpop.permute.xlu0 %679
    %683 = vset.pattern.permute.xlu0 0
    %684 = vperm.xlu0 %683, %v610
    %v685 = vpop.permute.xlu0 %684
    %688 = vset.pattern.permute.xlu0 0
    %689 = vperm.xlu0 %688, %v611
    %v690 = vpop.permute.xlu0 %689
    %693 = vset.pattern.permute.xlu0 0
    %694 = vperm.xlu0 %693, %v612
    %v695 = vpop.permute.xlu0 %694
    %698 = vset.pattern.permute.xlu0 0
    %699 = vperm.xlu0 %698, %v613
    %v700 = vpop.permute.xlu0 %699
    %703 = vset.pattern.permute.xlu0 0
    %704 = vperm.xlu0 %703, %v614
    %v705 = vpop.permute.xlu0 %704
    %708 = vset.pattern.permute.xlu0 0
    %709 = vperm.xlu0 %708, %v615
    %v710 = vpop.permute.xlu0 %709
    %713 = vset.pattern.permute.xlu0 0
    %714 = vperm.xlu0 %713, %v616
    %v715 = vpop.permute.xlu0 %714
    %718 = vset.pattern.permute.xlu0 0
    %719 = vperm.xlu0 %718, %v617
    %v720 = vpop.permute.xlu0 %719
    %723 = vset.pattern.permute.xlu0 0
    %724 = vperm.xlu0 %723, %v618
    %v725 = vpop.permute.xlu0 %724
    %728 = vset.pattern.permute.xlu0 0
    %729 = vperm.xlu0 %728, %v619
    %v730 = vpop.permute.xlu0 %729
    %733 = vset.pattern.permute.xlu0 0
    %734 = vperm.xlu0 %733, %v620
    %v735 = vpop.permute.xlu0 %734
    %738 = vset.pattern.permute.xlu0 0
    %739 = vperm.xlu0 %738, %v621
    %v740 = vpop.permute.xlu0 %739
    %743 = vset.pattern.permute.xlu0 0
    %744 = vperm.xlu0 %743, %v622
    %v745 = vpop.permute.xlu0 %744
    %748 = vset.pattern.permute.xlu0 0
    %749 = vperm.xlu0 %748, %v623
    %v750 = vpop.permute.xlu0 %749
    %753 = vset.pattern.permute.xlu0 0
    %754 = vperm.xlu0 %753, %v624
    %v755 = vpop.permute.xlu0 %754
    %758 = vset.pattern.permute.xlu0 0
    %759 = vperm.xlu0 %758, %v625
    %v760 = vpop.permute.xlu0 %759
    %763 = vset.pattern.permute.xlu0 0
    %764 = vperm.xlu0 %763, %v626
    %v765 = vpop.permute.xlu0 %764
    %768 = vset.pattern.permute.xlu0 0
    %769 = vperm.xlu0 %768, %v627
    %v770 = vpop.permute.xlu0 %769
    %773 = vset.pattern.permute.xlu0 0
    %774 = vperm.xlu0 %773, %v628
    %v775 = vpop.permute.xlu0 %774
    %778 = vset.pattern.permute.xlu0 0
    %779 = vperm.xlu0 %778, %v629
    %v780 = vpop.permute.xlu0 %779
    %783 = vset.pattern.permute.xlu0 0
    %784 = vperm.xlu0 %783, %v630
    %v785 = vpop.permute.xlu0 %784
    %788 = vset.pattern.permute.xlu0 0
    %789 = vperm.xlu0 %788, %v631
    %v790 = vpop.permute.xlu0 %789
    %v793 = vlaneseq
    %v794 = vshrl.u32 %v793, 7
    %v795 = vsub.s32 0, %v794
    %v796 = vrot.slane %v117, %v795
    %v797 = vlaneseq
    %v798 = vshrl.u32 %v797, 7
    %v799 = vsub.s32 1, %v798
    %v800 = vrot.slane %v117, %v799
    %v803 = vadd.f32 %v635, %v796
    %v804 = vadd.f32 %v635, %v800
    %v805 = vadd.f32 %v640, %v796
    %v806 = vadd.f32 %v640, %v800
    %v807 = vadd.f32 %v645, %v796
    %v808 = vadd.f32 %v645, %v800
    %v809 = vadd.f32 %v650, %v796
    %v810 = vadd.f32 %v650, %v800
    %v811 = vadd.f32 %v655, %v796
    %v812 = vadd.f32 %v655, %v800
    %v813 = vadd.f32 %v660, %v796
    %v814 = vadd.f32 %v660, %v800
    %v815 = vadd.f32 %v665, %v796
    %v816 = vadd.f32 %v665, %v800
    %v817 = vadd.f32 %v670, %v796
    %v818 = vadd.f32 %v670, %v800
    %v819 = vadd.f32 %v675, %v796
    %v820 = vadd.f32 %v675, %v800
    %v821 = vadd.f32 %v680, %v796
    %v822 = vadd.f32 %v680, %v800
    %v823 = vadd.f32 %v685, %v796
    %v824 = vadd.f32 %v685, %v800
    %v825 = vadd.f32 %v690, %v796
    %v826 = vadd.f32 %v690, %v800
    %v827 = vadd.f32 %v695, %v796
    %v828 = vadd.f32 %v695, %v800
    %v829 = vadd.f32 %v700, %v796
    %v830 = vadd.f32 %v700, %v800
    %v831 = vadd.f32 %v705, %v796
    %v832 = vadd.f32 %v705, %v800
    %v833 = vadd.f32 %v710, %v796
    %v834 = vadd.f32 %v710, %v800
    %v835 = vadd.f32 %v715, %v796
    %v836 = vadd.f32 %v715, %v800
    %v837 = vadd.f32 %v720, %v796
    %v838 = vadd.f32 %v720, %v800
    %v839 = vadd.f32 %v725, %v796
    %v840 = vadd.f32 %v725, %v800
    %v841 = vadd.f32 %v730, %v796
    %v842 = vadd.f32 %v730, %v800
    %v843 = vadd.f32 %v735, %v796
    %v844 = vadd.f32 %v735, %v800
    %v845 = vadd.f32 %v740, %v796
    %v846 = vadd.f32 %v740, %v800
    %v847 = vadd.f32 %v745, %v796
    %v848 = vadd.f32 %v745, %v800
    %v849 = vadd.f32 %v750, %v796
    %v850 = vadd.f32 %v750, %v800
    %v851 = vadd.f32 %v755, %v796
    %v852 = vadd.f32 %v755, %v800
    %v853 = vadd.f32 %v760, %v796
    %v854 = vadd.f32 %v760, %v800
    %v855 = vadd.f32 %v765, %v796
    %v856 = vadd.f32 %v765, %v800
    %v857 = vadd.f32 %v770, %v796
    %v858 = vadd.f32 %v770, %v800
    %v859 = vadd.f32 %v775, %v796
    %v860 = vadd.f32 %v775, %v800
    %v861 = vadd.f32 %v780, %v796
    %v862 = vadd.f32 %v780, %v800
    %v863 = vadd.f32 %v785, %v796
    %v864 = vadd.f32 %v785, %v800
    %v865 = vadd.f32 %v790, %v796
    %v866 = vadd.f32 %v790, %v800
    %v867 = vmul.f32 %v442, 2.0
    %v868 = vmul.f32 %v444, 2.0
    %v869 = vmul.f32 %v446, 2.0
    %v870 = vmul.f32 %v448, 2.0
    %v871 = vmul.f32 %v452, 2.0
    %v872 = vmul.f32 %v454, 2.0
    %v873 = vmul.f32 %v456, 2.0
    %v874 = vmul.f32 %v458, 2.0
    %v875 = vmul.f32 %v462, 2.0
    %v876 = vmul.f32 %v464, 2.0
    %v877 = vmul.f32 %v466, 2.0
    %v878 = vmul.f32 %v468, 2.0
    %v879 = vmul.f32 %v472, 2.0
    %v880 = vmul.f32 %v474, 2.0
    %v881 = vmul.f32 %v476, 2.0
    %v882 = vmul.f32 %v478, 2.0
    %v883 = vmul.f32 %v482, 2.0
    %v884 = vmul.f32 %v484, 2.0
    %v885 = vmul.f32 %v486, 2.0
    %v886 = vmul.f32 %v488, 2.0
    %v887 = vmul.f32 %v492, 2.0
    %v888 = vmul.f32 %v494, 2.0
    %v889 = vmul.f32 %v496, 2.0
    %v890 = vmul.f32 %v498, 2.0
    %v891 = vmul.f32 %v502, 2.0
    %v892 = vmul.f32 %v504, 2.0
    %v893 = vmul.f32 %v506, 2.0
    %v894 = vmul.f32 %v508, 2.0
    %v895 = vmul.f32 %v512, 2.0
    %v896 = vmul.f32 %v514, 2.0
    %v897 = vmul.f32 %v516, 2.0
    %v898 = vmul.f32 %v518, 2.0
    %v899 = vmul.f32 %v522, 2.0
    %v900 = vmul.f32 %v524, 2.0
    %v901 = vmul.f32 %v526, 2.0
    %v902 = vmul.f32 %v528, 2.0
    %v903 = vmul.f32 %v532, 2.0
    %v904 = vmul.f32 %v534, 2.0
    %v905 = vmul.f32 %v536, 2.0
    %v906 = vmul.f32 %v538, 2.0
    %v907 = vmul.f32 %v542, 2.0
    %v908 = vmul.f32 %v544, 2.0
    %v909 = vmul.f32 %v546, 2.0
    %v910 = vmul.f32 %v548, 2.0
    %v911 = vmul.f32 %v552, 2.0
    %v912 = vmul.f32 %v554, 2.0
    %v913 = vmul.f32 %v556, 2.0
    %v914 = vmul.f32 %v558, 2.0
    %v915 = vmul.f32 %v562, 2.0
    %v916 = vmul.f32 %v564, 2.0
    %v917 = vmul.f32 %v566, 2.0
    %v918 = vmul.f32 %v568, 2.0
    %v919 = vmul.f32 %v572, 2.0
    %v920 = vmul.f32 %v574, 2.0
    %v921 = vmul.f32 %v576, 2.0
    %v922 = vmul.f32 %v578, 2.0
    %v923 = vmul.f32 %v582, 2.0
    %v924 = vmul.f32 %v584, 2.0
    %v925 = vmul.f32 %v586, 2.0
    %v926 = vmul.f32 %v588, 2.0
    %v927 = vmul.f32 %v592, 2.0
    %v928 = vmul.f32 %v594, 2.0
    %v929 = vmul.f32 %v596, 2.0
    %v930 = vmul.f32 %v598, 2.0
    %v931 = vsub.f32 %v803, %v867
    %v932 = vsub.f32 %v804, %v868
    %v933 = vsub.f32 %v805, %v869
    %v934 = vsub.f32 %v806, %v870
    %v935 = vsub.f32 %v807, %v871
    %v936 = vsub.f32 %v808, %v872
    %v937 = vsub.f32 %v809, %v873
    %v938 = vsub.f32 %v810, %v874
    %v939 = vsub.f32 %v811, %v875
    %v940 = vsub.f32 %v812, %v876
    %v941 = vsub.f32 %v813, %v877
    %v942 = vsub.f32 %v814, %v878
    %v943 = vsub.f32 %v815, %v879
    %v944 = vsub.f32 %v816, %v880
    %v945 = vsub.f32 %v817, %v881
    %v946 = vsub.f32 %v818, %v882
    %v947 = vsub.f32 %v819, %v883
    %v948 = vsub.f32 %v820, %v884
    %v949 = vsub.f32 %v821, %v885
    %v950 = vsub.f32 %v822, %v886
    %v951 = vsub.f32 %v823, %v887
    %v952 = vsub.f32 %v824, %v888
    %v953 = vsub.f32 %v825, %v889
    %v954 = vsub.f32 %v826, %v890
    %v955 = vsub.f32 %v827, %v891
    %v956 = vsub.f32 %v828, %v892
    %v957 = vsub.f32 %v829, %v893
    %v958 = vsub.f32 %v830, %v894
    %v959 = vsub.f32 %v831, %v895
    %v960 = vsub.f32 %v832, %v896
    %v961 = vsub.f32 %v833, %v897
    %v962 = vsub.f32 %v834, %v898
    %v963 = vsub.f32 %v835, %v899
    %v964 = vsub.f32 %v836, %v900
    %v965 = vsub.f32 %v837, %v901
    %v966 = vsub.f32 %v838, %v902
    %v967 = vsub.f32 %v839, %v903
    %v968 = vsub.f32 %v840, %v904
    %v969 = vsub.f32 %v841, %v905
    %v970 = vsub.f32 %v842, %v906
    %v971 = vsub.f32 %v843, %v907
    %v972 = vsub.f32 %v844, %v908
    %v973 = vsub.f32 %v845, %v909
    %v974 = vsub.f32 %v846, %v910
    %v975 = vsub.f32 %v847, %v911
    %v976 = vsub.f32 %v848, %v912
    %v977 = vsub.f32 %v849, %v913
    %v978 = vsub.f32 %v850, %v914
    %v979 = vsub.f32 %v851, %v915
    %v980 = vsub.f32 %v852, %v916
    %v981 = vsub.f32 %v853, %v917
    %v982 = vsub.f32 %v854, %v918
    %v983 = vsub.f32 %v855, %v919
    %v984 = vsub.f32 %v856, %v920
    %v985 = vsub.f32 %v857, %v921
    %v986 = vsub.f32 %v858, %v922
    %v987 = vsub.f32 %v859, %v923
    %v988 = vsub.f32 %v860, %v924
    %v989 = vsub.f32 %v861, %v925
    %v990 = vsub.f32 %v862, %v926
    %v991 = vsub.f32 %v863, %v927
    %v992 = vsub.f32 %v864, %v928
    %v993 = vsub.f32 %v865, %v929
    %v994 = vsub.f32 %v866, %v930
    %v995 = vmax.f32 %v931, 0.0
    %v996 = vmax.f32 %v932, 0.0
    %v997 = vmax.f32 %v933, 0.0
    %v998 = vmax.f32 %v934, 0.0
    %v999 = vmax.f32 %v935, 0.0
    %v1000 = vmax.f32 %v936, 0.0
    %v1001 = vmax.f32 %v937, 0.0
    %v1002 = vmax.f32 %v938, 0.0
    %v1003 = vmax.f32 %v939, 0.0
    %v1004 = vmax.f32 %v940, 0.0
    %v1005 = vmax.f32 %v941, 0.0
    %v1006 = vmax.f32 %v942, 0.0
    %v1007 = vmax.f32 %v943, 0.0
    %v1008 = vmax.f32 %v944, 0.0
    %v1009 = vmax.f32 %v945, 0.0
    %v1010 = vmax.f32 %v946, 0.0
    %v1011 = vmax.f32 %v947, 0.0
    %v1012 = vmax.f32 %v948, 0.0
    %v1013 = vmax.f32 %v949, 0.0
    %v1014 = vmax.f32 %v950, 0.0
    %v1015 = vmax.f32 %v951, 0.0
    %v1016 = vmax.f32 %v952, 0.0
    %v1017 = vmax.f32 %v953, 0.0
    %v1018 = vmax.f32 %v954, 0.0
    %v1019 = vmax.f32 %v955, 0.0
    %v1020 = vmax.f32 %v956, 0.0
    %v1021 = vmax.f32 %v957, 0.0
    %v1022 = vmax.f32 %v958, 0.0
    %v1023 = vmax.f32 %v959, 0.0
    %v1024 = vmax.f32 %v960, 0.0
    %v1025 = vmax.f32 %v961, 0.0
    %v1026 = vmax.f32 %v962, 0.0
    %v1027 = vmax.f32 %v963, 0.0
    %v1028 = vmax.f32 %v964, 0.0
    %v1029 = vmax.f32 %v965, 0.0
    %v1030 = vmax.f32 %v966, 0.0
    %v1031 = vmax.f32 %v967, 0.0
    %v1032 = vmax.f32 %v968, 0.0
    %v1033 = vmax.f32 %v969, 0.0
    %v1034 = vmax.f32 %v970, 0.0
    %v1035 = vmax.f32 %v971, 0.0
    %v1036 = vmax.f32 %v972, 0.0
    %v1037 = vmax.f32 %v973, 0.0
    %v1038 = vmax.f32 %v974, 0.0
    %v1039 = vmax.f32 %v975, 0.0
    %v1040 = vmax.f32 %v976, 0.0
    %v1041 = vmax.f32 %v977, 0.0
    %v1042 = vmax.f32 %v978, 0.0
    %v1043 = vmax.f32 %v979, 0.0
    %v1044 = vmax.f32 %v980, 0.0
    %v1045 = vmax.f32 %v981, 0.0
    %v1046 = vmax.f32 %v982, 0.0
    %v1047 = vmax.f32 %v983, 0.0
    %v1048 = vmax.f32 %v984, 0.0
    %v1049 = vmax.f32 %v985, 0.0
    %v1050 = vmax.f32 %v986, 0.0
    %v1051 = vmax.f32 %v987, 0.0
    %v1052 = vmax.f32 %v988, 0.0
    %v1053 = vmax.f32 %v989, 0.0
    %v1054 = vmax.f32 %v990, 0.0
    %v1055 = vmax.f32 %v991, 0.0
    %v1056 = vmax.f32 %v992, 0.0
    %v1057 = vmax.f32 %v993, 0.0
    %v1058 = vmax.f32 %v994, 0.0
    %v1059 = vstv %s76
    %v1060 = vmul.f32 %v995, %v1059
    %v1061 = vmul.f32 %v996, %v1059
    %v1062 = vmul.f32 %v997, %v1059
    %v1063 = vmul.f32 %v998, %v1059
    %v1064 = vmul.f32 %v999, %v1059
    %v1065 = vmul.f32 %v1000, %v1059
    %v1066 = vmul.f32 %v1001, %v1059
    %v1067 = vmul.f32 %v1002, %v1059
    %v1068 = vmul.f32 %v1003, %v1059
    %v1069 = vmul.f32 %v1004, %v1059
    %v1070 = vmul.f32 %v1005, %v1059
    %v1071 = vmul.f32 %v1006, %v1059
    %v1072 = vmul.f32 %v1007, %v1059
    %v1073 = vmul.f32 %v1008, %v1059
    %v1074 = vmul.f32 %v1009, %v1059
    %v1075 = vmul.f32 %v1010, %v1059
    %v1076 = vmul.f32 %v1011, %v1059
    %v1077 = vmul.f32 %v1012, %v1059
    %v1078 = vmul.f32 %v1013, %v1059
    %v1079 = vmul.f32 %v1014, %v1059
    %v1080 = vmul.f32 %v1015, %v1059
    %v1081 = vmul.f32 %v1016, %v1059
    %v1082 = vmul.f32 %v1017, %v1059
    %v1083 = vmul.f32 %v1018, %v1059
    %v1084 = vmul.f32 %v1019, %v1059
    %v1085 = vmul.f32 %v1020, %v1059
    %v1086 = vmul.f32 %v1021, %v1059
    %v1087 = vmul.f32 %v1022, %v1059
    %v1088 = vmul.f32 %v1023, %v1059
    %v1089 = vmul.f32 %v1024, %v1059
    %v1090 = vmul.f32 %v1025, %v1059
    %v1091 = vmul.f32 %v1026, %v1059
    %v1092 = vmul.f32 %v1027, %v1059
    %v1093 = vmul.f32 %v1028, %v1059
    %v1094 = vmul.f32 %v1029, %v1059
    %v1095 = vmul.f32 %v1030, %v1059
    %v1096 = vmul.f32 %v1031, %v1059
    %v1097 = vmul.f32 %v1032, %v1059
    %v1098 = vmul.f32 %v1033, %v1059
    %v1099 = vmul.f32 %v1034, %v1059
    %v1100 = vmul.f32 %v1035, %v1059
    %v1101 = vmul.f32 %v1036, %v1059
    %v1102 = vmul.f32 %v1037, %v1059
    %v1103 = vmul.f32 %v1038, %v1059
    %v1104 = vmul.f32 %v1039, %v1059
    %v1105 = vmul.f32 %v1040, %v1059
    %v1106 = vmul.f32 %v1041, %v1059
    %v1107 = vmul.f32 %v1042, %v1059
    %v1108 = vmul.f32 %v1043, %v1059
    %v1109 = vmul.f32 %v1044, %v1059
    %v1110 = vmul.f32 %v1045, %v1059
    %v1111 = vmul.f32 %v1046, %v1059
    %v1112 = vmul.f32 %v1047, %v1059
    %v1113 = vmul.f32 %v1048, %v1059
    %v1114 = vmul.f32 %v1049, %v1059
    %v1115 = vmul.f32 %v1050, %v1059
    %v1116 = vmul.f32 %v1051, %v1059
    %v1117 = vmul.f32 %v1052, %v1059
    %v1118 = vmul.f32 %v1053, %v1059
    %v1119 = vmul.f32 %v1054, %v1059
    %v1120 = vmul.f32 %v1055, %v1059
    %v1121 = vmul.f32 %v1056, %v1059
    %v1122 = vmul.f32 %v1057, %v1059
    %v1123 = vmul.f32 %v1058, %v1059
    %v1124 = vmul.f32 %v1060, 1.442695
    %v1125 = vpow.pop %v1124
    %v1126 = vmul.f32 %v1061, 1.442695
    %v1127 = vpow.pop %v1126
    %v1128 = vmul.f32 %v1062, 1.442695
    %v1129 = vpow.pop %v1128
    %v1130 = vmul.f32 %v1063, 1.442695
    %v1131 = vpow.pop %v1130
    %v1132 = vmul.f32 %v1064, 1.442695
    %v1133 = vpow.pop %v1132
    %v1134 = vmul.f32 %v1065, 1.442695
    %v1135 = vpow.pop %v1134
    %v1136 = vmul.f32 %v1066, 1.442695
    %v1137 = vpow.pop %v1136
    %v1138 = vmul.f32 %v1067, 1.442695
    %v1139 = vpow.pop %v1138
    %v1140 = vmul.f32 %v1068, 1.442695
    %v1141 = vpow.pop %v1140
    %v1142 = vmul.f32 %v1069, 1.442695
    %v1143 = vpow.pop %v1142
    %v1144 = vmul.f32 %v1070, 1.442695
    %v1145 = vpow.pop %v1144
    %v1146 = vmul.f32 %v1071, 1.442695
    %v1147 = vpow.pop %v1146
    %v1148 = vmul.f32 %v1072, 1.442695
    %v1149 = vpow.pop %v1148
    %v1150 = vmul.f32 %v1073, 1.442695
    %v1151 = vpow.pop %v1150
    %v1152 = vmul.f32 %v1074, 1.442695
    %v1153 = vpow.pop %v1152
    %v1154 = vmul.f32 %v1075, 1.442695
    %v1155 = vpow.pop %v1154
    %v1156 = vmul.f32 %v1076, 1.442695
    %v1157 = vpow.pop %v1156
    %v1158 = vmul.f32 %v1077, 1.442695
    %v1159 = vpow.pop %v1158
    %v1160 = vmul.f32 %v1078, 1.442695
    %v1161 = vpow.pop %v1160
    %v1162 = vmul.f32 %v1079, 1.442695
    %v1163 = vpow.pop %v1162
    %v1164 = vmul.f32 %v1080, 1.442695
    %v1165 = vpow.pop %v1164
    %v1166 = vmul.f32 %v1081, 1.442695
    %v1167 = vpow.pop %v1166
    %v1168 = vmul.f32 %v1082, 1.442695
    %v1169 = vpow.pop %v1168
    %v1170 = vmul.f32 %v1083, 1.442695
    %v1171 = vpow.pop %v1170
    %v1172 = vmul.f32 %v1084, 1.442695
    %v1173 = vpow.pop %v1172
    %v1174 = vmul.f32 %v1085, 1.442695
    %v1175 = vpow.pop %v1174
    %v1176 = vmul.f32 %v1086, 1.442695
    %v1177 = vpow.pop %v1176
    %v1178 = vmul.f32 %v1087, 1.442695
    %v1179 = vpow.pop %v1178
    %v1180 = vmul.f32 %v1088, 1.442695
    %v1181 = vpow.pop %v1180
    %v1182 = vmul.f32 %v1089, 1.442695
    %v1183 = vpow.pop %v1182
    %v1184 = vmul.f32 %v1090, 1.442695
    %v1185 = vpow.pop %v1184
    %v1186 = vmul.f32 %v1091, 1.442695
    %v1187 = vpow.pop %v1186
    %v1188 = vmul.f32 %v1092, 1.442695
    %v1189 = vpow.pop %v1188
    %v1190 = vmul.f32 %v1093, 1.442695
    %v1191 = vpow.pop %v1190
    %v1192 = vmul.f32 %v1094, 1.442695
    %v1193 = vpow.pop %v1192
    %v1194 = vmul.f32 %v1095, 1.442695
    %v1195 = vpow.pop %v1194
    %v1196 = vmul.f32 %v1096, 1.442695
    %v1197 = vpow.pop %v1196
    %v1198 = vmul.f32 %v1097, 1.442695
    %v1199 = vpow.pop %v1198
    %v1200 = vmul.f32 %v1098, 1.442695
    %v1201 = vpow.pop %v1200
    %v1202 = vmul.f32 %v1099, 1.442695
    %v1203 = vpow.pop %v1202
    %v1204 = vmul.f32 %v1100, 1.442695
    %v1205 = vpow.pop %v1204
    %v1206 = vmul.f32 %v1101, 1.442695
    %v1207 = vpow.pop %v1206
    %v1208 = vmul.f32 %v1102, 1.442695
    %v1209 = vpow.pop %v1208
    %v1210 = vmul.f32 %v1103, 1.442695
    %v1211 = vpow.pop %v1210
    %v1212 = vmul.f32 %v1104, 1.442695
    %v1213 = vpow.pop %v1212
    %v1214 = vmul.f32 %v1105, 1.442695
    %v1215 = vpow.pop %v1214
    %v1216 = vmul.f32 %v1106, 1.442695
    %v1217 = vpow.pop %v1216
    %v1218 = vmul.f32 %v1107, 1.442695
    %v1219 = vpow.pop %v1218
    %v1220 = vmul.f32 %v1108, 1.442695
    %v1221 = vpow.pop %v1220
    %v1222 = vmul.f32 %v1109, 1.442695
    %v1223 = vpow.pop %v1222
    %v1224 = vmul.f32 %v1110, 1.442695
    %v1225 = vpow.pop %v1224
    %v1226 = vmul.f32 %v1111, 1.442695
    %v1227 = vpow.pop %v1226
    %v1228 = vmul.f32 %v1112, 1.442695
    %v1229 = vpow.pop %v1228
    %v1230 = vmul.f32 %v1113, 1.442695
    %v1231 = vpow.pop %v1230
    %v1232 = vmul.f32 %v1114, 1.442695
    %v1233 = vpow.pop %v1232
    %v1234 = vmul.f32 %v1115, 1.442695
    %v1235 = vpow.pop %v1234
    %v1236 = vmul.f32 %v1116, 1.442695
    %v1237 = vpow.pop %v1236
    %v1238 = vmul.f32 %v1117, 1.442695
    %v1239 = vpow.pop %v1238
    %v1240 = vmul.f32 %v1118, 1.442695
    %v1241 = vpow.pop %v1240
    %v1242 = vmul.f32 %v1119, 1.442695
    %v1243 = vpow.pop %v1242
    %v1244 = vmul.f32 %v1120, 1.442695
    %v1245 = vpow.pop %v1244
    %v1246 = vmul.f32 %v1121, 1.442695
    %v1247 = vpow.pop %v1246
    %v1248 = vmul.f32 %v1122, 1.442695
    %v1249 = vpow.pop %v1248
    %v1250 = vmul.f32 %v1123, 1.442695
    %v1251 = vpow.pop %v1250
    %p1252 = scmp.ne.s32.totalorder 0, 0
    // Predicated region
    $region38: #{tpu_custom_call.1} parent=1 // pred_check
      %p1253 = pneg %p1252
    $region39: #{tpu_custom_call.1} parent=1 // pred_check_branch
      %1255 = sbr.rel (%p1253) target = $region41
    $region40: #{tpu_custom_call.1} parent=1 // pred_region
      %1256 = vst [vmem:[#allocation11] sm:$0xff] %v1125
      %1257 = vst [vmem:[#allocation11 + $0x8] sm:$0xff] %v1127
      %1258 = vst [vmem:[#allocation11 + $0x10] sm:$0xff] %v1129
      %1259 = vst [vmem:[#allocation11 + $0x18] sm:$0xff] %v1131
      %1260 = vst [vmem:[#allocation11 + $0x20] sm:$0xff] %v1133
      %1261 = vst [vmem:[#allocation11 + $0x28] sm:$0xff] %v1135
      %1262 = vst [vmem:[#allocation11 + $0x30] sm:$0xff] %v1137
      %1263 = vst [vmem:[#allocation11 + $0x38] sm:$0xff] %v1139
      %1264 = vst [vmem:[#allocation11 + $0x40] sm:$0xff] %v1141
      %1265 = vst [vmem:[#allocation11 + $0x48] sm:$0xff] %v1143
      %1266 = vst [vmem:[#allocation11 + $0x50] sm:$0xff] %v1145
      %1267 = vst [vmem:[#allocation11 + $0x58] sm:$0xff] %v1147
      %1268 = vst [vmem:[#allocation11 + $0x60] sm:$0xff] %v1149
      %1269 = vst [vmem:[#allocation11 + $0x68] sm:$0xff] %v1151
      %1270 = vst [vmem:[#allocation11 + $0x70] sm:$0xff] %v1153
      %1271 = vst [vmem:[#allocation11 + $0x78] sm:$0xff] %v1155
      %1272 = vst [vmem:[#allocation11 + $0x80] sm:$0xff] %v1157
      %1273 = vst [vmem:[#allocation11 + $0x88] sm:$0xff] %v1159
      %1274 = vst [vmem:[#allocation11 + $0x90] sm:$0xff] %v1161
      %1275 = vst [vmem:[#allocation11 + $0x98] sm:$0xff] %v1163
      %1276 = vst [vmem:[#allocation11 + $0xa0] sm:$0xff] %v1165
      %1277 = vst [vmem:[#allocation11 + $0xa8] sm:$0xff] %v1167
      %1278 = vst [vmem:[#allocation11 + $0xb0] sm:$0xff] %v1169
      %1279 = vst [vmem:[#allocation11 + $0xb8] sm:$0xff] %v1171
      %1280 = vst [vmem:[#allocation11 + $0xc0] sm:$0xff] %v1173
      %1281 = vst [vmem:[#allocation11 + $0xc8] sm:$0xff] %v1175
      %1282 = vst [vmem:[#allocation11 + $0xd0] sm:$0xff] %v1177
      %1283 = vst [vmem:[#allocation11 + $0xd8] sm:$0xff] %v1179
      %1284 = vst [vmem:[#allocation11 + $0xe0] sm:$0xff] %v1181
      %1285 = vst [vmem:[#allocation11 + $0xe8] sm:$0xff] %v1183
      %1286 = vst [vmem:[#allocation11 + $0xf0] sm:$0xff] %v1185
      %1287 = vst [vmem:[#allocation11 + $0xf8] sm:$0xff] %v1187
      %1288 = vst [vmem:[#allocation11 + $0x100] sm:$0xff] %v1189
      %1289 = vst [vmem:[#allocation11 + $0x108] sm:$0xff] %v1191
      %1290 = vst [vmem:[#allocation11 + $0x110] sm:$0xff] %v1193
      %1291 = vst [vmem:[#allocation11 + $0x118] sm:$0xff] %v1195
      %1292 = vst [vmem:[#allocation11 + $0x120] sm:$0xff] %v1197
      %1293 = vst [vmem:[#allocation11 + $0x128] sm:$0xff] %v1199
      %1294 = vst [vmem:[#allocation11 + $0x130] sm:$0xff] %v1201
      %1295 = vst [vmem:[#allocation11 + $0x138] sm:$0xff] %v1203
      %1296 = vst [vmem:[#allocation11 + $0x140] sm:$0xff] %v1205
      %1297 = vst [vmem:[#allocation11 + $0x148] sm:$0xff] %v1207
      %1298 = vst [vmem:[#allocation11 + $0x150] sm:$0xff] %v1209
      %1299 = vst [vmem:[#allocation11 + $0x158] sm:$0xff] %v1211
      %1300 = vst [vmem:[#allocation11 + $0x160] sm:$0xff] %v1213
      %1301 = vst [vmem:[#allocation11 + $0x168] sm:$0xff] %v1215
      %1302 = vst [vmem:[#allocation11 + $0x170] sm:$0xff] %v1217
      %1303 = vst [vmem:[#allocation11 + $0x178] sm:$0xff] %v1219
      %1304 = vst [vmem:[#allocation11 + $0x180] sm:$0xff] %v1221
      %1305 = vst [vmem:[#allocation11 + $0x188] sm:$0xff] %v1223
      %1306 = vst [vmem:[#allocation11 + $0x190] sm:$0xff] %v1225
      %1307 = vst [vmem:[#allocation11 + $0x198] sm:$0xff] %v1227
      %1308 = vst [vmem:[#allocation11 + $0x1a0] sm:$0xff] %v1229
      %1309 = vst [vmem:[#allocation11 + $0x1a8] sm:$0xff] %v1231
      %1310 = vst [vmem:[#allocation11 + $0x1b0] sm:$0xff] %v1233
      %1311 = vst [vmem:[#allocation11 + $0x1b8] sm:$0xff] %v1235
      %1312 = vst [vmem:[#allocation11 + $0x1c0] sm:$0xff] %v1237
      %1313 = vst [vmem:[#allocation11 + $0x1c8] sm:$0xff] %v1239
      %1314 = vst [vmem:[#allocation11 + $0x1d0] sm:$0xff] %v1241
      %1315 = vst [vmem:[#allocation11 + $0x1d8] sm:$0xff] %v1243
      %1316 = vst [vmem:[#allocation11 + $0x1e0] sm:$0xff] %v1245
      %1317 = vst [vmem:[#allocation11 + $0x1e8] sm:$0xff] %v1247
      %1318 = vst [vmem:[#allocation11 + $0x1f0] sm:$0xff] %v1249
      %1319 = vst [vmem:[#allocation11 + $0x1f8] sm:$0xff] %v1251
    $region41: #{tpu_custom_call.1} parent=1 // pred_fallthru
      _
    %p1320 = scmp.eq.s32.totalorder 0, 0
    // Predicated region
    $region42: #{tpu_custom_call.1} parent=1 // pred_check
      %p1321 = pneg %p1320
    $region43: #{tpu_custom_call.1} parent=1 // pred_check_branch
      %1323 = sbr.rel (%p1321) target = $region45
    $region44: #{tpu_custom_call.1} parent=1 // pred_region
      %v1324 = vlaneseq
      %v1325 = vshrl.u32 %v1324, 7
      %v1326 = vadd.s32 %v1325, 8
      %v1327 = vadd.s32 %v1325, 16
      %v1328 = vadd.s32 %v1325, 24
      %v1329 = vadd.s32 %v1325, 32
      %v1330 = vadd.s32 %v1325, 40
      %v1331 = vadd.s32 %v1325, 48
      %v1332 = vadd.s32 %v1325, 56
      %v1333 = vadd.s32 %v1325, 64
      %v1334 = vadd.s32 %v1325, 72
      %v1335 = vadd.s32 %v1325, 80
      %v1336 = vadd.s32 %v1325, 88
      %v1337 = vadd.s32 %v1325, 96
      %v1338 = vadd.s32 %v1325, 104
      %v1339 = vadd.s32 %v1325, 112
      %v1340 = vadd.s32 %v1325, 120
      %v1341 = vadd.s32 %v1325, 128
      %v1342 = vadd.s32 %v1325, 136
      %v1343 = vadd.s32 %v1325, 144
      %v1344 = vadd.s32 %v1325, 152
      %v1345 = vadd.s32 %v1325, 160
      %v1346 = vadd.s32 %v1325, 168
      %v1347 = vadd.s32 %v1325, 176
      %v1348 = vadd.s32 %v1325, 184
      %v1349 = vadd.s32 %v1325, 192
      %v1350 = vadd.s32 %v1325, 200
      %v1351 = vadd.s32 %v1325, 208
      %v1352 = vadd.s32 %v1325, 216
      %v1353 = vadd.s32 %v1325, 224
      %v1354 = vadd.s32 %v1325, 232
      %v1355 = vadd.s32 %v1325, 240
      %v1356 = vadd.s32 %v1325, 248
      %v1357 = vlaneseq
      %v1358 = vand.u32 %v1357, 127
      %v1359 = vadd.s32 %v1358, 128
      %vm1360 = vcmp.eq.s32.totalorder %v1325, %v1358
      %vm1361 = vcmp.eq.s32.totalorder %v1325, %v1359
      %vm1362 = vcmp.eq.s32.totalorder %v1326, %v1358
      %vm1363 = vcmp.eq.s32.totalorder %v1326, %v1359
      %vm1364 = vcmp.eq.s32.totalorder %v1327, %v1358
      %vm1365 = vcmp.eq.s32.totalorder %v1327, %v1359
      %vm1366 = vcmp.eq.s32.totalorder %v1328, %v1358
      %vm1367 = vcmp.eq.s32.totalorder %v1328, %v1359
      %vm1368 = vcmp.eq.s32.totalorder %v1329, %v1358
      %vm1369 = vcmp.eq.s32.totalorder %v1329, %v1359
      %vm1370 = vcmp.eq.s32.totalorder %v1330, %v1358
      %vm1371 = vcmp.eq.s32.totalorder %v1330, %v1359
      %vm1372 = vcmp.eq.s32.totalorder %v1331, %v1358
      %vm1373 = vcmp.eq.s32.totalorder %v1331, %v1359
      %vm1374 = vcmp.eq.s32.totalorder %v1332, %v1358
      %vm1375 = vcmp.eq.s32.totalorder %v1332, %v1359
      %vm1376 = vcmp.eq.s32.totalorder %v1333, %v1358
      %vm1377 = vcmp.eq.s32.totalorder %v1333, %v1359
      %vm1378 = vcmp.eq.s32.totalorder %v1334, %v1358
      %vm1379 = vcmp.eq.s32.totalorder %v1334, %v1359
      %vm1380 = vcmp.eq.s32.totalorder %v1335, %v1358
      %vm1381 = vcmp.eq.s32.totalorder %v1335, %v1359
      %vm1382 = vcmp.eq.s32.totalorder %v1336, %v1358
      %vm1383 = vcmp.eq.s32.totalorder %v1336, %v1359
      %vm1384 = vcmp.eq.s32.totalorder %v1337, %v1358
      %vm1385 = vcmp.eq.s32.totalorder %v1337, %v1359
      %vm1386 = vcmp.eq.s32.totalorder %v1338, %v1358
      %vm1387 = vcmp.eq.s32.totalorder %v1338, %v1359
      %vm1388 = vcmp.eq.s32.totalorder %v1339, %v1358
      %vm1389 = vcmp.eq.s32.totalorder %v1339, %v1359
      %vm1390 = vcmp.eq.s32.totalorder %v1340, %v1358
      %vm1391 = vcmp.eq.s32.totalorder %v1340, %v1359
      %vm1392 = vcmp.eq.s32.totalorder %v1341, %v1358
      %vm1393 = vcmp.eq.s32.totalorder %v1341, %v1359
      %vm1394 = vcmp.eq.s32.totalorder %v1342, %v1358
      %vm1395 = vcmp.eq.s32.totalorder %v1342, %v1359
      %vm1396 = vcmp.eq.s32.totalorder %v1343, %v1358
      %vm1397 = vcmp.eq.s32.totalorder %v1343, %v1359
      %vm1398 = vcmp.eq.s32.totalorder %v1344, %v1358
      %vm1399 = vcmp.eq.s32.totalorder %v1344, %v1359
      %vm1400 = vcmp.eq.s32.totalorder %v1345, %v1358
      %vm1401 = vcmp.eq.s32.totalorder %v1345, %v1359
      %vm1402 = vcmp.eq.s32.totalorder %v1346, %v1358
      %vm1403 = vcmp.eq.s32.totalorder %v1346, %v1359
      %vm1404 = vcmp.eq.s32.totalorder %v1347, %v1358
      %vm1405 = vcmp.eq.s32.totalorder %v1347, %v1359
      %vm1406 = vcmp.eq.s32.totalorder %v1348, %v1358
      %vm1407 = vcmp.eq.s32.totalorder %v1348, %v1359
      %vm1408 = vcmp.eq.s32.totalorder %v1349, %v1358
      %vm1409 = vcmp.eq.s32.totalorder %v1349, %v1359
      %vm1410 = vcmp.eq.s32.totalorder %v1350, %v1358
      %vm1411 = vcmp.eq.s32.totalorder %v1350, %v1359
      %vm1412 = vcmp.eq.s32.totalorder %v1351, %v1358
      %vm1413 = vcmp.eq.s32.totalorder %v1351, %v1359
      %vm1414 = vcmp.eq.s32.totalorder %v1352, %v1358
      %vm1415 = vcmp.eq.s32.totalorder %v1352, %v1359
      %vm1416 = vcmp.eq.s32.totalorder %v1353, %v1358
      %vm1417 = vcmp.eq.s32.totalorder %v1353, %v1359
      %vm1418 = vcmp.eq.s32.totalorder %v1354, %v1358
      %vm1419 = vcmp.eq.s32.totalorder %v1354, %v1359
      %vm1420 = vcmp.eq.s32.totalorder %v1355, %v1358
      %vm1421 = vcmp.eq.s32.totalorder %v1355, %v1359
      %vm1422 = vcmp.eq.s32.totalorder %v1356, %v1358
      %vm1423 = vcmp.eq.s32.totalorder %v1356, %v1359
      %v1424 = vsel %vm1360, -inf, %v1125
      %v1425 = vsel %vm1361, -inf, %v1127
      %v1426 = vsel %vm1362, -inf, %v1129
      %v1427 = vsel %vm1363, -inf, %v1131
      %v1428 = vsel %vm1364, -inf, %v1133
      %v1429 = vsel %vm1365, -inf, %v1135
      %v1430 = vsel %vm1366, -inf, %v1137
      %v1431 = vsel %vm1367, -inf, %v1139
      %v1432 = vsel %vm1368, -inf, %v1141
      %v1433 = vsel %vm1369, -inf, %v1143
      %v1434 = vsel %vm1370, -inf, %v1145
      %v1435 = vsel %vm1371, -inf, %v1147
      %v1436 = vsel %vm1372, -inf, %v1149
      %v1437 = vsel %vm1373, -inf, %v1151
      %v1438 = vsel %vm1374, -inf, %v1153
      %v1439 = vsel %vm1375, -inf, %v1155
      %v1440 = vsel %vm1376, -inf, %v1157
      %v1441 = vsel %vm1377, -inf, %v1159
      %v1442 = vsel %vm1378, -inf, %v1161
      %v1443 = vsel %vm1379, -inf, %v1163
      %v1444 = vsel %vm1380, -inf, %v1165
      %v1445 = vsel %vm1381, -inf, %v1167
      %v1446 = vsel %vm1382, -inf, %v1169
      %v1447 = vsel %vm1383, -inf, %v1171
      %v1448 = vsel %vm1384, -inf, %v1173
      %v1449 = vsel %vm1385, -inf, %v1175
      %v1450 = vsel %vm1386, -inf, %v1177
      %v1451 = vsel %vm1387, -inf, %v1179
      %v1452 = vsel %vm1388, -inf, %v1181
      %v1453 = vsel %vm1389, -inf, %v1183
      %v1454 = vsel %vm1390, -inf, %v1185
      %v1455 = vsel %vm1391, -inf, %v1187
      %v1456 = vsel %vm1392, -inf, %v1189
      %v1457 = vsel %vm1393, -inf, %v1191
      %v1458 = vsel %vm1394, -inf, %v1193
      %v1459 = vsel %vm1395, -inf, %v1195
      %v1460 = vsel %vm1396, -inf, %v1197
      %v1461 = vsel %vm1397, -inf, %v1199
      %v1462 = vsel %vm1398, -inf, %v1201
      %v1463 = vsel %vm1399, -inf, %v1203
      %v1464 = vsel %vm1400, -inf, %v1205
      %v1465 = vsel %vm1401, -inf, %v1207
      %v1466 = vsel %vm1402, -inf, %v1209
      %v1467 = vsel %vm1403, -inf, %v1211
      %v1468 = vsel %vm1404, -inf, %v1213
      %v1469 = vsel %vm1405, -inf, %v1215
      %v1470 = vsel %vm1406, -inf, %v1217
      %v1471 = vsel %vm1407, -inf, %v1219
      %v1472 = vsel %vm1408, -inf, %v1221
      %v1473 = vsel %vm1409, -inf, %v1223
      %v1474 = vsel %vm1410, -inf, %v1225
      %v1475 = vsel %vm1411, -inf, %v1227
      %v1476 = vsel %vm1412, -inf, %v1229
      %v1477 = vsel %vm1413, -inf, %v1231
      %v1478 = vsel %vm1414, -inf, %v1233
      %v1479 = vsel %vm1415, -inf, %v1235
      %v1480 = vsel %vm1416, -inf, %v1237
      %v1481 = vsel %vm1417, -inf, %v1239
      %v1482 = vsel %vm1418, -inf, %v1241
      %v1483 = vsel %vm1419, -inf, %v1243
      %v1484 = vsel %vm1420, -inf, %v1245
      %v1485 = vsel %vm1421, -inf, %v1247
      %v1486 = vsel %vm1422, -inf, %v1249
      %v1487 = vsel %vm1423, -inf, %v1251
      %1488 = vst [vmem:[#allocation11] sm:$0xff] %v1424
      %1489 = vst [vmem:[#allocation11 + $0x8] sm:$0xff] %v1425
      %1490 = vst [vmem:[#allocation11 + $0x10] sm:$0xff] %v1426
      %1491 = vst [vmem:[#allocation11 + $0x18] sm:$0xff] %v1427
      %1492 = vst [vmem:[#allocation11 + $0x20] sm:$0xff] %v1428
      %1493 = vst [vmem:[#allocation11 + $0x28] sm:$0xff] %v1429
      %1494 = vst [vmem:[#allocation11 + $0x30] sm:$0xff] %v1430
      %1495 = vst [vmem:[#allocation11 + $0x38] sm:$0xff] %v1431
      %1496 = vst [vmem:[#allocation11 + $0x40] sm:$0xff] %v1432
      %1497 = vst [vmem:[#allocation11 + $0x48] sm:$0xff] %v1433
      %1498 = vst [vmem:[#allocation11 + $0x50] sm:$0xff] %v1434
      %1499 = vst [vmem:[#allocation11 + $0x58] sm:$0xff] %v1435
      %1500 = vst [vmem:[#allocation11 + $0x60] sm:$0xff] %v1436
      %1501 = vst [vmem:[#allocation11 + $0x68] sm:$0xff] %v1437
      %1502 = vst [vmem:[#allocation11 + $0x70] sm:$0xff] %v1438
      %1503 = vst [vmem:[#allocation11 + $0x78] sm:$0xff] %v1439
      %1504 = vst [vmem:[#allocation11 + $0x80] sm:$0xff] %v1440
      %1505 = vst [vmem:[#allocation11 + $0x88] sm:$0xff] %v1441
      %1506 = vst [vmem:[#allocation11 + $0x90] sm:$0xff] %v1442
      %1507 = vst [vmem:[#allocation11 + $0x98] sm:$0xff] %v1443
      %1508 = vst [vmem:[#allocation11 + $0xa0] sm:$0xff] %v1444
      %1509 = vst [vmem:[#allocation11 + $0xa8] sm:$0xff] %v1445
      %1510 = vst [vmem:[#allocation11 + $0xb0] sm:$0xff] %v1446
      %1511 = vst [vmem:[#allocation11 + $0xb8] sm:$0xff] %v1447
      %1512 = vst [vmem:[#allocation11 + $0xc0] sm:$0xff] %v1448
      %1513 = vst [vmem:[#allocation11 + $0xc8] sm:$0xff] %v1449
      %1514 = vst [vmem:[#allocation11 + $0xd0] sm:$0xff] %v1450
      %1515 = vst [vmem:[#allocation11 + $0xd8] sm:$0xff] %v1451
      %1516 = vst [vmem:[#allocation11 + $0xe0] sm:$0xff] %v1452
      %1517 = vst [vmem:[#allocation11 + $0xe8] sm:$0xff] %v1453
      %1518 = vst [vmem:[#allocation11 + $0xf0] sm:$0xff] %v1454
      %1519 = vst [vmem:[#allocation11 + $0xf8] sm:$0xff] %v1455
      %1520 = vst [vmem:[#allocation11 + $0x100] sm:$0xff] %v1456
      %1521 = vst [vmem:[#allocation11 + $0x108] sm:$0xff] %v1457
      %1522 = vst [vmem:[#allocation11 + $0x110] sm:$0xff] %v1458
      %1523 = vst [vmem:[#allocation11 + $0x118] sm:$0xff] %v1459
      %1524 = vst [vmem:[#allocation11 + $0x120] sm:$0xff] %v1460
      %1525 = vst [vmem:[#allocation11 + $0x128] sm:$0xff] %v1461
      %1526 = vst [vmem:[#allocation11 + $0x130] sm:$0xff] %v1462
      %1527 = vst [vmem:[#allocation11 + $0x138] sm:$0xff] %v1463
      %1528 = vst [vmem:[#allocation11 + $0x140] sm:$0xff] %v1464
      %1529 = vst [vmem:[#allocation11 + $0x148] sm:$0xff] %v1465
      %1530 = vst [vmem:[#allocation11 + $0x150] sm:$0xff] %v1466
      %1531 = vst [vmem:[#allocation11 + $0x158] sm:$0xff] %v1467
      %1532 = vst [vmem:[#allocation11 + $0x160] sm:$0xff] %v1468
      %1533 = vst [vmem:[#allocation11 + $0x168] sm:$0xff] %v1469
      %1534 = vst [vmem:[#allocation11 + $0x170] sm:$0xff] %v1470
      %1535 = vst [vmem:[#allocation11 + $0x178] sm:$0xff] %v1471
      %1536 = vst [vmem:[#allocation11 + $0x180] sm:$0xff] %v1472
      %1537 = vst [vmem:[#allocation11 + $0x188] sm:$0xff] %v1473
      %1538 = vst [vmem:[#allocation11 + $0x190] sm:$0xff] %v1474
      %1539 = vst [vmem:[#allocation11 + $0x198] sm:$0xff] %v1475
      %1540 = vst [vmem:[#allocation11 + $0x1a0] sm:$0xff] %v1476
      %1541 = vst [vmem:[#allocation11 + $0x1a8] sm:$0xff] %v1477
      %1542 = vst [vmem:[#allocation11 + $0x1b0] sm:$0xff] %v1478
      %1543 = vst [vmem:[#allocation11 + $0x1b8] sm:$0xff] %v1479
      %1544 = vst [vmem:[#allocation11 + $0x1c0] sm:$0xff] %v1480
      %1545 = vst [vmem:[#allocation11 + $0x1c8] sm:$0xff] %v1481
      %1546 = vst [vmem:[#allocation11 + $0x1d0] sm:$0xff] %v1482
      %1547 = vst [vmem:[#allocation11 + $0x1d8] sm:$0xff] %v1483
      %1548 = vst [vmem:[#allocation11 + $0x1e0] sm:$0xff] %v1484
      %1549 = vst [vmem:[#allocation11 + $0x1e8] sm:$0xff] %v1485
      %1550 = vst [vmem:[#allocation11 + $0x1f0] sm:$0xff] %v1486
      %1551 = vst [vmem:[#allocation11 + $0x1f8] sm:$0xff] %v1487
    $region45: #{tpu_custom_call.1} parent=1 // pred_fallthru
      _
    // Predicated region
    $region46: #{tpu_custom_call.1} parent=1 // pred_check
      _
    $region47: #{tpu_custom_call.1} parent=1 // pred_check_branch
      %1553 = sbr.rel (0) target = $region49
    $region48: #{tpu_custom_call.1} parent=1 // pred_region
      %s1555 = ssub.s32 8192, 8192
      %1556 = vsyncadd [#allocation5], %s1555
      %s1557 = sshll.u32 [#allocation11], 4
      %s1558 = int_to_ptr.vmem [resolvable:$true] %s1557
      %1563 = dma.vmem_to_hbm [thread:$0]  %s1558, 8192, %s5, [#allocation5], 256, 256, 16
    $region49: #{tpu_custom_call.1} parent=1 // pred_fallthru
      _
    // Predicated region
    $region50: #{tpu_custom_call.1} parent=1 // pred_check
      _
    $region51: #{tpu_custom_call.1} parent=1 // pred_check_branch
      %1565 = sbr.rel (0) target = $region53
    $region52: #{tpu_custom_call.1} parent=1 // pred_region
      %1566 = dma.done [#allocation5], 8192
    $region53: #{tpu_custom_call.1} parent=1 // pred_fallthru
      _
    %1567 = vsyncpa [#allocation4], 1
    %1568 = vsyncpa [#allocation7], 1
    %1569 = vsyncpa [#allocation10], 1
    %1570 = vsyncpa [#allocation5], 1

</llo_original>
